<compile_context>
chip_gen: v7x
topology: tpu7x:2x2x1
jax: 0.10.0
libtpu: 0.0.40
codegen_flags: <defaults>
</compile_context>

<pallas_src>
import jax
import jax.numpy as jnp
import numpy as np
from jax.experimental import pallas as pl
from jax.experimental.pallas import tpu as pltpu

# ---- module hyperparameters ----
H = 32          # channels (= LayerNorm normalized size = time length)
T_TIME = H      # time length; must equal H for nn.LayerNorm(H) applied to NCT
P = 3           # conv kernel size
DIL = 3         # dilation (ConvTasnet1 instantiation); conv padding = dilation
PAD = DIL
EPS = 1e-5      # nn.LayerNorm default eps
LANES = 128
NUM_BLOCKS = 2  # demo: fused stack of TemporalBlocks in one pallas_call
BATCH = 8       # B*T = 256 lanes -> one lane-dense tile (multiple of 128)


# --------------------------------------------------------------------------
# Fused kernel: a stack of TemporalBlocks on one (C, B*T) lane-dense tile.
#   per block: relu(LN(conv1(x))) -> dropout(identity) -> relu(LN(conv2(.))) + x
# --------------------------------------------------------------------------
def temporal_block_stack_kernel(x_ref, w1_ref, w2_ref, gamma_ref, beta_ref,
                                ss_ref, mask_l_ref, mask_r_ref, o_ref):
    nb = w1_ref.shape[0]
    c = x_ref.shape[0]
    n = x_ref.shape[1]
    mm = w1_ref.dtype                 # bf16 (fast path) or f32 (precise path)

    ss = ss_ref[...]                  # (N, N) block-diag segment-mean matrix (1/T folded in)
    mask_l = mask_l_ref[...]          # (1, N): zero where t <  PAD  (per batch segment)
    mask_r = mask_r_ref[...]          # (1, N): zero where t >= T-PAD

    def conv(v, w_l, w_c, w_r):
        # Dilated taps via XLU roll + VPU edge mask (zero padding baked in, so taps
        # never leak across batch segments).  Conv bias omitted: it is constant
        # along the normalized time axis and cancels exactly in LayerNorm.
        vl = pltpu.roll(v, PAD, 1) * mask_l        # x[t - PAD]
        vr = pltpu.roll(v, n - PAD, 1) * mask_r    # x[t + PAD]  (roll by -PAD, kept non-negative)
        y = jnp.dot(w_l, vl.astype(mm), preferred_element_type=jnp.float32)
        y = y + jnp.dot(w_c, v.astype(mm), preferred_element_type=jnp.float32)
        y = y + jnp.dot(w_r, vr.astype(mm), preferred_element_type=jnp.float32)
        return y                                   # (C, N) f32

    def ln_relu(y, gamma, beta):
        # LayerNorm over time per batch segment: mean and E[y^2] from ONE matmul
        # on the stacked [y; y*y] LHS; var = E[y^2] - mean^2 (f32 accumulation).
        mom = jnp.dot(jnp.concatenate([y, y * y], axis=0).astype(mm), ss,
                      preferred_element_type=jnp.float32)       # (2C, N)
        mean = mom[:c]
        var = mom[c:] - mean * mean
        yhat = (y - mean) * jax.lax.rsqrt(var + EPS)
        return jnp.maximum(yhat * gamma + beta, 0.0)

    h = x_ref[...]                                              # (C, N) f32
    for b in range(nb):                                         # static unroll
        gamma = gamma_ref[b]                                    # (1, N)
        beta = beta_ref[b]
        residual = h
        h1 = ln_relu(conv(h, w1_ref[b, 0], w1_ref[b, 1], w1_ref[b, 2]), gamma, beta)
        # TODO(synk): nn.Dropout(0.2) is identity here (inference); training would
        # need pltpu.prng_seed + pltpu.prng_random_bits masking.
        h2 = ln_relu(conv(h1, w2_ref[b, 0], w2_ref[b, 1], w2_ref[b, 2]), gamma, beta)
        h = h2 + residual
    o_ref[...] = h                                              # lane-dense store


# --------------------------------------------------------------------------
# Parameter creation (PyTorch shapes) and one-time packing to kernel layout.
# --------------------------------------------------------------------------
def init_params(key, num_blocks, scale=0.1):
    """PyTorch-shaped parameters for a stack of TemporalBlocks."""
    blocks = []
    keys = jax.random.split(key, 6 * num_blocks)
    for i in range(num_blocks):
        k0, k1, k2, k3, k4, k5 = keys[6 * i: 6 * i + 6]
        blocks.append(dict(
            w1=scale * jax.random.normal(k0, (H, H, P), jnp.float32),   # (out,in,k)
            b1=scale * jax.random.normal(k1, (H,), jnp.float32),
            w2=scale * jax.random.normal(k2, (H, H, P), jnp.float32),
            b2=scale * jax.random.normal(k3, (H,), jnp.float32),
            # non-default affine so the test actually exercises gamma/beta packing
            gamma=1.0 + 0.1 * jax.random.normal(k4, (H,), jnp.float32),
            beta=0.1 * jax.random.normal(k5, (H,), jnp.float32),
        ))
    return blocks


def pack_params(blocks, batch, mm_dtype=jnp.bfloat16):
    """One-time repack to kernel layout (done at init, not per forward call)."""
    n = batch * T_TIME

    def taps(w):                      # (out, in, k) -> (k, out, in): per-tap matrices
        return jnp.transpose(w, (2, 0, 1))

    # Conv biases b1/b2 are deliberately NOT packed: constant along the normalized
    # (time) axis, they cancel exactly inside LayerNorm.
    packed = dict(
        w1=jnp.stack([taps(bk["w1"]) for bk in blocks]).astype(mm_dtype),  # (NB,P,H,H)
        w2=jnp.stack([taps(bk["w2"]) for bk in blocks]).astype(mm_dtype),
        gamma=jnp.stack([jnp.tile(bk["gamma"], batch).reshape(1, n)
                         for bk in blocks]),                               # (NB,1,N) f32
        beta=jnp.stack([jnp.tile(bk["beta"], batch).reshape(1, n)
                        for bk in blocks]),
    )
    t = jnp.arange(n) % T_TIME
    seg = jnp.arange(n) // T_TIME
    # Segment-mean matrix with 1/T folded in (0 and 1/32 are exact in bf16).
    packed["ss"] = jnp.where(seg[:, None] == seg[None, :],
                             1.0 / T_TIME, 0.0).astype(mm_dtype)           # (N, N)
    # Edge masks zeroing the PAD lanes at each segment boundary (conv zero padding).
    packed["mask_l"] = (t >= PAD).astype(jnp.float32).reshape(1, n)
    packed["mask_r"] = (t < T_TIME - PAD).astype(jnp.float32).reshape(1, n)
    return packed


# --------------------------------------------------------------------------
# Wrapper: NCT in / NCT out, whole batch folded into the lane axis, one call.
# --------------------------------------------------------------------------
@jax.jit
def temporal_block_stack(x_nct, packed):
    """Requires B*T to be a multiple of 128 (pad the batch otherwise)."""
    bsz, c, t = x_nct.shape
    assert c == H and t == T_TIME
    n = packed["ss"].shape[0]
    assert n == bsz * t and n % LANES == 0, "pack_params batch must match x"

    # Fold batch into lanes: (B, C, T) -> (C, B*T).  Two small XLA transposes; at
    # these sizes they add one extra HBM round trip of x / out (acceptable here).
    x_l = jnp.transpose(x_nct, (1, 0, 2)).reshape(c, n)

    # Single grid step (grid-less pallas_call): every operand is resident in VMEM
    # once, constants are not double-buffered, and N = B*T fills the MXU width.
    out = pl.pallas_call(
        temporal_block_stack_kernel,
        out_shape=jax.ShapeDtypeStruct((c, n), jnp.float32),
    )(x_l, packed["w1"], packed["w2"], packed["gamma"], packed["beta"],
      packed["ss"], packed["mask_l"], packed["mask_r"])

    # Unfold back to NCT.
    return jnp.transpose(out.reshape(c, bsz, t), (1, 0, 2))


# --------------------------------------------------------------------------
# Pure-JAX reference for TemporalBlock.forward (inference semantics).
# --------------------------------------------------------------------------
def temporal_block_ref(x, blk):
    _, _, t = x.shape
    hi = jax.lax.Precision.HIGHEST   # genuine f32 reference (no silent bf16 matmuls)

    def conv(v, w, b):
        vp = jnp.pad(v, ((0, 0), (0, 0), (PAD, PAD)))
        y = b[None, :, None]
        for k in range(P):
            y = y + jnp.einsum("oc,bct->bot", w[:, :, k],
                               vp[:, :, k * DIL:k * DIL + t], precision=hi)
        return y

    def ln_relu(y):
        mean = jnp.mean(y, axis=-1, keepdims=True)
        var = jnp.mean((y - mean) ** 2, axis=-1, keepdims=True)
        yhat = (y - mean) * jax.lax.rsqrt(var + EPS)
        return jnp.maximum(yhat * blk["gamma"] + blk["beta"], 0.0)

    h1 = ln_relu(conv(x, blk["w1"], blk["b1"]))      # dropout: identity (inference)
    h2 = ln_relu(conv(h1, blk["w2"], blk["b2"]))
    return h2 + x


if __name__ == "__main__":
    root = jax.random.PRNGKey(0)
    kx, kp = jax.random.split(root)
    blocks = init_params(kp, NUM_BLOCKS)
    x = jax.random.normal(kx, (BATCH, H, T_TIME), jnp.float32)

    # --- single TemporalBlock (exact module forward) ---
    ref1 = temporal_block_ref(x, blocks[0])

    # Precise all-f32 variant at tight tolerance: any layout / packing / tap-order
    # bug would show as O(0.1+) errors; the remaining floor is MXU f32 emulation.
    out1_f32 = temporal_block_stack(x, pack_params(blocks[:1], BATCH, jnp.float32))
    jax.block_until_ready(out1_f32)
    np.testing.assert_allclose(np.asarray(out1_f32), np.asarray(ref1),
                               rtol=1e-4, atol=1e-4)

    # Fast bf16-MXU variant (the deploy path): the looser tolerance is the bf16
    # input-rounding floor, not a correctness hedge (see tight f32 check above).
    out1 = temporal_block_stack(x, pack_params(blocks[:1], BATCH, jnp.bfloat16))
    jax.block_until_ready(out1)
    np.testing.assert_allclose(np.asarray(out1), np.asarray(ref1),
                               rtol=5e-2, atol=5e-2)

    # --- fused 2-block stack (still one pallas_call) ---
    out2 = temporal_block_stack(x, pack_params(blocks, BATCH, jnp.bfloat16))
    jax.block_until_ready(out2)
    ref2 = x
    for blk in blocks:
        ref2 = temporal_block_ref(ref2, blk)
    np.testing.assert_allclose(np.asarray(out2), np.asarray(ref2),
                               rtol=5e-2, atol=5e-2)

    assert out1.shape == (BATCH, H, T_TIME) and out1.dtype == jnp.float32
    print("KERNEL_OK")
</pallas_src>

<mosaic_0001>
module attributes {stable_mosaic.version = 11 : i64} {
  func.func @temporal_block_stack_kernel(%arg0: memref<32x256xf32, #tpu.memory_space<vmem>>, %arg1: memref<1x3x32x32xf32, #tpu.memory_space<vmem>>, %arg2: memref<1x3x32x32xf32, #tpu.memory_space<vmem>>, %arg3: memref<1x1x256xf32, #tpu.memory_space<vmem>>, %arg4: memref<1x1x256xf32, #tpu.memory_space<vmem>>, %arg5: memref<256x256xf32, #tpu.memory_space<vmem>>, %arg6: memref<1x256xf32, #tpu.memory_space<vmem>>, %arg7: memref<1x256xf32, #tpu.memory_space<vmem>>, %arg8: memref<32x256xf32, #tpu.memory_space<vmem>>) attributes {dimension_semantics = [], scalar_prefetch = 0 : i64, scratch_operands = 0 : i64, tpu.core_type = #tpu.core_type<tc>} {
    %c0 = arith.constant 0 : index
    %c0_0 = arith.constant 0 : index
    %0 = vector.load %arg5[%c0, %c0_0] : memref<256x256xf32, #tpu.memory_space<vmem>>, vector<256x256xf32>
    %c0_1 = arith.constant 0 : index
    %c0_2 = arith.constant 0 : index
    %1 = vector.load %arg6[%c0_1, %c0_2] : memref<1x256xf32, #tpu.memory_space<vmem>>, vector<1x256xf32>
    %c0_3 = arith.constant 0 : index
    %c0_4 = arith.constant 0 : index
    %2 = vector.load %arg7[%c0_3, %c0_4] : memref<1x256xf32, #tpu.memory_space<vmem>>, vector<1x256xf32>
    %c0_5 = arith.constant 0 : index
    %c0_6 = arith.constant 0 : index
    %3 = vector.load %arg0[%c0_5, %c0_6] : memref<32x256xf32, #tpu.memory_space<vmem>>, vector<32x256xf32>
    %c0_7 = arith.constant 0 : index
    %c0_8 = arith.constant 0 : index
    %c0_9 = arith.constant 0 : index
    %4 = vector.load %arg3[%c0_7, %c0_8, %c0_9] : memref<1x1x256xf32, #tpu.memory_space<vmem>>, vector<1x1x256xf32>
    %5 = vector.shape_cast %4 : vector<1x1x256xf32> to vector<1x256xf32>
    %c0_10 = arith.constant 0 : index
    %c0_11 = arith.constant 0 : index
    %c0_12 = arith.constant 0 : index
    %6 = vector.load %arg4[%c0_10, %c0_11, %c0_12] : memref<1x1x256xf32, #tpu.memory_space<vmem>>, vector<1x1x256xf32>
    %7 = vector.shape_cast %6 : vector<1x1x256xf32> to vector<1x256xf32>
    %c0_13 = arith.constant 0 : index
    %c0_14 = arith.constant 0 : index
    %c0_15 = arith.constant 0 : index
    %c0_16 = arith.constant 0 : index
    %8 = vector.load %arg1[%c0_13, %c0_14, %c0_15, %c0_16] : memref<1x3x32x32xf32, #tpu.memory_space<vmem>>, vector<1x1x32x32xf32>
    %9 = vector.shape_cast %8 : vector<1x1x32x32xf32> to vector<32x32xf32>
    %c0_17 = arith.constant 0 : index
    %c1 = arith.constant 1 : index
    %c0_18 = arith.constant 0 : index
    %c0_19 = arith.constant 0 : index
    %10 = vector.load %arg1[%c0_17, %c1, %c0_18, %c0_19] : memref<1x3x32x32xf32, #tpu.memory_space<vmem>>, vector<1x1x32x32xf32>
    %11 = vector.shape_cast %10 : vector<1x1x32x32xf32> to vector<32x32xf32>
    %c0_20 = arith.constant 0 : index
    %c2 = arith.constant 2 : index
    %c0_21 = arith.constant 0 : index
    %c0_22 = arith.constant 0 : index
    %12 = vector.load %arg1[%c0_20, %c2, %c0_21, %c0_22] : memref<1x3x32x32xf32, #tpu.memory_space<vmem>>, vector<1x1x32x32xf32>
    %13 = vector.shape_cast %12 : vector<1x1x32x32xf32> to vector<32x32xf32>
    %c3_i32 = arith.constant 3 : i32
    %14 = tpu.dynamic_rotate %3 by %c3_i32 dim 1 : vector<32x256xf32>, i32 -> vector<32x256xf32>
    %15 = vector.broadcast %1 : vector<1x256xf32> to vector<32x256xf32>
    %16 = arith.mulf %14, %15 : vector<32x256xf32>
    %c253_i32 = arith.constant 253 : i32
    %17 = tpu.dynamic_rotate %3 by %c253_i32 dim 1 : vector<32x256xf32>, i32 -> vector<32x256xf32>
    %18 = vector.broadcast %2 : vector<1x256xf32> to vector<32x256xf32>
    %19 = arith.mulf %17, %18 : vector<32x256xf32>
    %cst = arith.constant dense<0.000000e+00> : vector<32x256xf32>
    %20 = tpu.matmul %9, %16, %cst {dimension_numbers = #tpu.dot_dimension_numbers<[1], [0], [0], [1], [0, 0, 1, 1], [], []>} : vector<32x32xf32>, vector<32x256xf32>, vector<32x256xf32> -> vector<32x256xf32>
    %cst_23 = arith.constant dense<0.000000e+00> : vector<32x256xf32>
    %21 = tpu.matmul %11, %3, %cst_23 {dimension_numbers = #tpu.dot_dimension_numbers<[1], [0], [0], [1], [0, 0, 1, 1], [], []>} : vector<32x32xf32>, vector<32x256xf32>, vector<32x256xf32> -> vector<32x256xf32>
    %22 = arith.addf %20, %21 : vector<32x256xf32>
    %cst_24 = arith.constant dense<0.000000e+00> : vector<32x256xf32>
    %23 = tpu.matmul %13, %19, %cst_24 {dimension_numbers = #tpu.dot_dimension_numbers<[1], [0], [0], [1], [0, 0, 1, 1], [], []>} : vector<32x32xf32>, vector<32x256xf32>, vector<32x256xf32> -> vector<32x256xf32>
    %24 = arith.addf %22, %23 : vector<32x256xf32>
    %25 = arith.mulf %24, %24 : vector<32x256xf32>
    %26 = tpu.concatenate %24, %25 in 0 : vector<32x256xf32>, vector<32x256xf32> -> vector<64x256xf32>
    %cst_25 = arith.constant dense<0.000000e+00> : vector<64x256xf32>
    %27 = tpu.matmul %26, %0, %cst_25 {dimension_numbers = #tpu.dot_dimension_numbers<[1], [0], [0], [1], [0, 0, 1, 1], [], []>} : vector<64x256xf32>, vector<256x256xf32>, vector<64x256xf32> -> vector<64x256xf32>
    %28 = vector.extract_strided_slice %27 {offsets = [0, 0], sizes = [32, 256], strides = [1, 1]} : vector<64x256xf32> to vector<32x256xf32>
    %29 = vector.extract_strided_slice %27 {offsets = [32, 0], sizes = [32, 256], strides = [1, 1]} : vector<64x256xf32> to vector<32x256xf32>
    %30 = arith.mulf %28, %28 : vector<32x256xf32>
    %31 = arith.subf %29, %30 : vector<32x256xf32>
    %32 = arith.subf %24, %28 : vector<32x256xf32>
    %cst_26 = arith.constant 9.99999974E-6 : f32
    %33 = vector.broadcast %cst_26 : f32 to vector<32x256xf32>
    %34 = arith.addf %31, %33 : vector<32x256xf32>
    %35 = math.rsqrt %34 : vector<32x256xf32>
    %36 = arith.mulf %32, %35 : vector<32x256xf32>
    %37 = vector.broadcast %5 : vector<1x256xf32> to vector<32x256xf32>
    %38 = arith.mulf %36, %37 : vector<32x256xf32>
    %39 = vector.broadcast %7 : vector<1x256xf32> to vector<32x256xf32>
    %40 = arith.addf %38, %39 : vector<32x256xf32>
    %cst_27 = arith.constant 0.000000e+00 : f32
    %41 = vector.broadcast %cst_27 : f32 to vector<32x256xf32>
    %42 = arith.maximumf %40, %41 : vector<32x256xf32>
    %c0_28 = arith.constant 0 : index
    %c0_29 = arith.constant 0 : index
    %c0_30 = arith.constant 0 : index
    %c0_31 = arith.constant 0 : index
    %43 = vector.load %arg2[%c0_28, %c0_29, %c0_30, %c0_31] : memref<1x3x32x32xf32, #tpu.memory_space<vmem>>, vector<1x1x32x32xf32>
    %44 = vector.shape_cast %43 : vector<1x1x32x32xf32> to vector<32x32xf32>
    %c0_32 = arith.constant 0 : index
    %c1_33 = arith.constant 1 : index
    %c0_34 = arith.constant 0 : index
    %c0_35 = arith.constant 0 : index
    %45 = vector.load %arg2[%c0_32, %c1_33, %c0_34, %c0_35] : memref<1x3x32x32xf32, #tpu.memory_space<vmem>>, vector<1x1x32x32xf32>
    %46 = vector.shape_cast %45 : vector<1x1x32x32xf32> to vector<32x32xf32>
    %c0_36 = arith.constant 0 : index
    %c2_37 = arith.constant 2 : index
    %c0_38 = arith.constant 0 : index
    %c0_39 = arith.constant 0 : index
    %47 = vector.load %arg2[%c0_36, %c2_37, %c0_38, %c0_39] : memref<1x3x32x32xf32, #tpu.memory_space<vmem>>, vector<1x1x32x32xf32>
    %48 = vector.shape_cast %47 : vector<1x1x32x32xf32> to vector<32x32xf32>
    %c3_i32_40 = arith.constant 3 : i32
    %49 = tpu.dynamic_rotate %42 by %c3_i32_40 dim 1 : vector<32x256xf32>, i32 -> vector<32x256xf32>
    %50 = vector.broadcast %1 : vector<1x256xf32> to vector<32x256xf32>
    %51 = arith.mulf %49, %50 : vector<32x256xf32>
    %c253_i32_41 = arith.constant 253 : i32
    %52 = tpu.dynamic_rotate %42 by %c253_i32_41 dim 1 : vector<32x256xf32>, i32 -> vector<32x256xf32>
    %53 = vector.broadcast %2 : vector<1x256xf32> to vector<32x256xf32>
    %54 = arith.mulf %52, %53 : vector<32x256xf32>
    %cst_42 = arith.constant dense<0.000000e+00> : vector<32x256xf32>
    %55 = tpu.matmul %44, %51, %cst_42 {dimension_numbers = #tpu.dot_dimension_numbers<[1], [0], [0], [1], [0, 0, 1, 1], [], []>} : vector<32x32xf32>, vector<32x256xf32>, vector<32x256xf32> -> vector<32x256xf32>
    %cst_43 = arith.constant dense<0.000000e+00> : vector<32x256xf32>
    %56 = tpu.matmul %46, %42, %cst_43 {dimension_numbers = #tpu.dot_dimension_numbers<[1], [0], [0], [1], [0, 0, 1, 1], [], []>} : vector<32x32xf32>, vector<32x256xf32>, vector<32x256xf32> -> vector<32x256xf32>
    %57 = arith.addf %55, %56 : vector<32x256xf32>
    %cst_44 = arith.constant dense<0.000000e+00> : vector<32x256xf32>
    %58 = tpu.matmul %48, %54, %cst_44 {dimension_numbers = #tpu.dot_dimension_numbers<[1], [0], [0], [1], [0, 0, 1, 1], [], []>} : vector<32x32xf32>, vector<32x256xf32>, vector<32x256xf32> -> vector<32x256xf32>
    %59 = arith.addf %57, %58 : vector<32x256xf32>
    %60 = arith.mulf %59, %59 : vector<32x256xf32>
    %61 = tpu.concatenate %59, %60 in 0 : vector<32x256xf32>, vector<32x256xf32> -> vector<64x256xf32>
    %cst_45 = arith.constant dense<0.000000e+00> : vector<64x256xf32>
    %62 = tpu.matmul %61, %0, %cst_45 {dimension_numbers = #tpu.dot_dimension_numbers<[1], [0], [0], [1], [0, 0, 1, 1], [], []>} : vector<64x256xf32>, vector<256x256xf32>, vector<64x256xf32> -> vector<64x256xf32>
    %63 = vector.extract_strided_slice %62 {offsets = [0, 0], sizes = [32, 256], strides = [1, 1]} : vector<64x256xf32> to vector<32x256xf32>
    %64 = vector.extract_strided_slice %62 {offsets = [32, 0], sizes = [32, 256], strides = [1, 1]} : vector<64x256xf32> to vector<32x256xf32>
    %65 = arith.mulf %63, %63 : vector<32x256xf32>
    %66 = arith.subf %64, %65 : vector<32x256xf32>
    %67 = arith.subf %59, %63 : vector<32x256xf32>
    %cst_46 = arith.constant 9.99999974E-6 : f32
    %68 = vector.broadcast %cst_46 : f32 to vector<32x256xf32>
    %69 = arith.addf %66, %68 : vector<32x256xf32>
    %70 = math.rsqrt %69 : vector<32x256xf32>
    %71 = arith.mulf %67, %70 : vector<32x256xf32>
    %72 = vector.broadcast %5 : vector<1x256xf32> to vector<32x256xf32>
    %73 = arith.mulf %71, %72 : vector<32x256xf32>
    %74 = vector.broadcast %7 : vector<1x256xf32> to vector<32x256xf32>
    %75 = arith.addf %73, %74 : vector<32x256xf32>
    %cst_47 = arith.constant 0.000000e+00 : f32
    %76 = vector.broadcast %cst_47 : f32 to vector<32x256xf32>
    %77 = arith.maximumf %75, %76 : vector<32x256xf32>
    %78 = arith.addf %77, %3 : vector<32x256xf32>
    %c0_48 = arith.constant 0 : index
    %c0_49 = arith.constant 0 : index
    %79 = vector.load %arg8[%c0_48, %c0_49] : memref<32x256xf32, #tpu.memory_space<vmem>>, vector<32x256xf32>
    tpu.vector_store %arg8[%c0_48, %c0_49], %78 {strides = array<i32>} : memref<32x256xf32, #tpu.memory_space<vmem>>, vector<32x256xf32>,
    return
  }
}

</mosaic_0001>

<llo_original>
// kernel: temporal_block_stack.1
$region0: #{temporal_block_stack.1}
  #allocation0 [shape = 'u32[]', space=smem, size = 0x4, offset = 0x4, fixed_abs, tag = 'smem constant byte address 0x4 - core index']
  #allocation1 [shape = 'u32[144,128]{1,0:T(1,128)}', space=vmem, size = 0x12000, scoped, tag = 'internal scratch']
  %s0 = inlined_call_operand.vmem [shape: f32[32,256], index: 0, kind: input, shape index: {}]
  %s1 = inlined_call_operand.vmem [shape: f32[1,3,32,32], index: 1, kind: input, shape index: {}]
  %s2 = inlined_call_operand.vmem [shape: f32[1,3,32,32], index: 2, kind: input, shape index: {}]
  %s3 = inlined_call_operand.vmem [shape: f32[1,1,256], index: 3, kind: input, shape index: {}]
  %s4 = inlined_call_operand.vmem [shape: f32[1,1,256], index: 4, kind: input, shape index: {}]
  %s5 = inlined_call_operand.vmem [shape: f32[256,256], index: 5, kind: input, shape index: {}]
  %s6 = inlined_call_operand.vmem [shape: f32[1,256], index: 6, kind: input, shape index: {}]
  %s7 = inlined_call_operand.vmem [shape: f32[1,256], index: 7, kind: input, shape index: {}]
  %s8 = inlined_call_operand.vmem [shape: f32[32,256], index: 8, kind: output, shape index: {}]
  %s9 = sld [smem:[#allocation0]]
  $region42: #{temporal_block_stack.1} parent=0
    _
  %s11 = ssub.s32 1, %s9
  %s12 = scalar_select 0, %s11, %s9
  // Predicated region
  $region2: #{temporal_block_stack.1} parent=0 // pred_check
    _
  $region3: #{temporal_block_stack.1} parent=0 // pred_check_branch
    %14 = sbr.rel (0) target = $region5
  $region4: #{temporal_block_stack.1} parent=0 // pred_region
    _
  $region5: #{temporal_block_stack.1} parent=0 // pred_fallthru
    _
  // Predicated region
  $region6: #{temporal_block_stack.1} parent=0 // pred_check
    _
  $region7: #{temporal_block_stack.1} parent=0 // pred_check_branch
    %16 = sbr.rel (0) target = $region9
  $region8: #{temporal_block_stack.1} parent=0 // pred_region
    _
  $region9: #{temporal_block_stack.1} parent=0 // pred_fallthru
    _
  // Predicated region
  $region10: #{temporal_block_stack.1} parent=0 // pred_check
    _
  $region11: #{temporal_block_stack.1} parent=0 // pred_check_branch
    %18 = sbr.rel (0) target = $region13
  $region12: #{temporal_block_stack.1} parent=0 // pred_region
    _
  $region13: #{temporal_block_stack.1} parent=0 // pred_fallthru
    _
  // Predicated region
  $region14: #{temporal_block_stack.1} parent=0 // pred_check
    _
  $region15: #{temporal_block_stack.1} parent=0 // pred_check_branch
    %20 = sbr.rel (0) target = $region17
  $region16: #{temporal_block_stack.1} parent=0 // pred_region
    _
  $region17: #{temporal_block_stack.1} parent=0 // pred_fallthru
    _
  // Predicated region
  $region18: #{temporal_block_stack.1} parent=0 // pred_check
    _
  $region19: #{temporal_block_stack.1} parent=0 // pred_check_branch
    %22 = sbr.rel (0) target = $region21
  $region20: #{temporal_block_stack.1} parent=0 // pred_region
    _
  $region21: #{temporal_block_stack.1} parent=0 // pred_fallthru
    _
  // Predicated region
  $region22: #{temporal_block_stack.1} parent=0 // pred_check
    _
  $region23: #{temporal_block_stack.1} parent=0 // pred_check_branch
    %24 = sbr.rel (0) target = $region25
  $region24: #{temporal_block_stack.1} parent=0 // pred_region
    _
  $region25: #{temporal_block_stack.1} parent=0 // pred_fallthru
    _
  // Predicated region
  $region26: #{temporal_block_stack.1} parent=0 // pred_check
    _
  $region27: #{temporal_block_stack.1} parent=0 // pred_check_branch
    %26 = sbr.rel (0) target = $region29
  $region28: #{temporal_block_stack.1} parent=0 // pred_region
    _
  $region29: #{temporal_block_stack.1} parent=0 // pred_fallthru
    _
  // Predicated region
  $region30: #{temporal_block_stack.1} parent=0 // pred_check
    _
  $region31: #{temporal_block_stack.1} parent=0 // pred_check_branch
    %28 = sbr.rel (0) target = $region33
  $region32: #{temporal_block_stack.1} parent=0 // pred_region
    _
  $region33: #{temporal_block_stack.1} parent=0 // pred_fallthru
    _
  %v29 = vld [vmem:[%s5] sm:$0xff]
  %v30 = vld [vmem:[%s5 + $0x8] sm:$0xff]
  %v31 = vld [vmem:[%s5 + $0x10] sm:$0xff]
  %v32 = vld [vmem:[%s5 + $0x18] sm:$0xff]
  %v33 = vld [vmem:[%s5 + $0x20] sm:$0xff]
  %v34 = vld [vmem:[%s5 + $0x28] sm:$0xff]
  %v35 = vld [vmem:[%s5 + $0x30] sm:$0xff]
  %v36 = vld [vmem:[%s5 + $0x38] sm:$0xff]
  %v37 = vld [vmem:[%s5 + $0x40] sm:$0xff]
  %v38 = vld [vmem:[%s5 + $0x48] sm:$0xff]
  %v39 = vld [vmem:[%s5 + $0x50] sm:$0xff]
  %v40 = vld [vmem:[%s5 + $0x58] sm:$0xff]
  %v41 = vld [vmem:[%s5 + $0x60] sm:$0xff]
  %v42 = vld [vmem:[%s5 + $0x68] sm:$0xff]
  %v43 = vld [vmem:[%s5 + $0x70] sm:$0xff]
  %v44 = vld [vmem:[%s5 + $0x78] sm:$0xff]
  %v45 = vld [vmem:[%s5 + $0x80] sm:$0xff]
  %v46 = vld [vmem:[%s5 + $0x88] sm:$0xff]
  %v47 = vld [vmem:[%s5 + $0x90] sm:$0xff]
  %v48 = vld [vmem:[%s5 + $0x98] sm:$0xff]
  %v49 = vld [vmem:[%s5 + $0xa0] sm:$0xff]
  %v50 = vld [vmem:[%s5 + $0xa8] sm:$0xff]
  %v51 = vld [vmem:[%s5 + $0xb0] sm:$0xff]
  %v52 = vld [vmem:[%s5 + $0xb8] sm:$0xff]
  %v53 = vld [vmem:[%s5 + $0xc0] sm:$0xff]
  %v54 = vld [vmem:[%s5 + $0xc8] sm:$0xff]
  %v55 = vld [vmem:[%s5 + $0xd0] sm:$0xff]
  %v56 = vld [vmem:[%s5 + $0xd8] sm:$0xff]
  %v57 = vld [vmem:[%s5 + $0xe0] sm:$0xff]
  %v58 = vld [vmem:[%s5 + $0xe8] sm:$0xff]
  %v59 = vld [vmem:[%s5 + $0xf0] sm:$0xff]
  %v60 = vld [vmem:[%s5 + $0xf8] sm:$0xff]
  %v61 = vld [vmem:[%s5 + $0x100] sm:$0xff]
  %v62 = vld [vmem:[%s5 + $0x108] sm:$0xff]
  %v63 = vld [vmem:[%s5 + $0x110] sm:$0xff]
  %v64 = vld [vmem:[%s5 + $0x118] sm:$0xff]
  %v65 = vld [vmem:[%s5 + $0x120] sm:$0xff]
  %v66 = vld [vmem:[%s5 + $0x128] sm:$0xff]
  %v67 = vld [vmem:[%s5 + $0x130] sm:$0xff]
  %v68 = vld [vmem:[%s5 + $0x138] sm:$0xff]
  %v69 = vld [vmem:[%s5 + $0x140] sm:$0xff]
  %v70 = vld [vmem:[%s5 + $0x148] sm:$0xff]
  %v71 = vld [vmem:[%s5 + $0x150] sm:$0xff]
  %v72 = vld [vmem:[%s5 + $0x158] sm:$0xff]
  %v73 = vld [vmem:[%s5 + $0x160] sm:$0xff]
  %v74 = vld [vmem:[%s5 + $0x168] sm:$0xff]
  %v75 = vld [vmem:[%s5 + $0x170] sm:$0xff]
  %v76 = vld [vmem:[%s5 + $0x178] sm:$0xff]
  %v77 = vld [vmem:[%s5 + $0x180] sm:$0xff]
  %v78 = vld [vmem:[%s5 + $0x188] sm:$0xff]
  %v79 = vld [vmem:[%s5 + $0x190] sm:$0xff]
  %v80 = vld [vmem:[%s5 + $0x198] sm:$0xff]
  %v81 = vld [vmem:[%s5 + $0x1a0] sm:$0xff]
  %v82 = vld [vmem:[%s5 + $0x1a8] sm:$0xff]
  %v83 = vld [vmem:[%s5 + $0x1b0] sm:$0xff]
  %v84 = vld [vmem:[%s5 + $0x1b8] sm:$0xff]
  %v85 = vld [vmem:[%s5 + $0x1c0] sm:$0xff]
  %v86 = vld [vmem:[%s5 + $0x1c8] sm:$0xff]
  %v87 = vld [vmem:[%s5 + $0x1d0] sm:$0xff]
  %v88 = vld [vmem:[%s5 + $0x1d8] sm:$0xff]
  %v89 = vld [vmem:[%s5 + $0x1e0] sm:$0xff]
  %v90 = vld [vmem:[%s5 + $0x1e8] sm:$0xff]
  %v91 = vld [vmem:[%s5 + $0x1f0] sm:$0xff]
  %v92 = vld [vmem:[%s5 + $0x1f8] sm:$0xff]
  %v93 = vld [vmem:[%s6] sm:$0x3]
  %v94 = vld [vmem:[%s7] sm:$0x3]
  %v95 = vld [vmem:[%s0] sm:$0xff]
  %v96 = vld [vmem:[%s0 + $0x8] sm:$0xff]
  %v97 = vld [vmem:[%s0 + $0x10] sm:$0xff]
  %v98 = vld [vmem:[%s0 + $0x18] sm:$0xff]
  %v99 = vld [vmem:[%s0 + $0x20] sm:$0xff]
  %v100 = vld [vmem:[%s0 + $0x28] sm:$0xff]
  %v101 = vld [vmem:[%s0 + $0x30] sm:$0xff]
  %v102 = vld [vmem:[%s0 + $0x38] sm:$0xff]
  %v103 = vld [vmem:[%s3] sm:$0x3]
  %v104 = vld [vmem:[%s4] sm:$0x3]
  %v105 = vld [vmem:[%s1] sm:$0xff]
  %v106 = vld [vmem:[%s1 + $0x8] sm:$0xff]
  %v107 = vld [vmem:[%s1 + $0x10] sm:$0xff]
  %v108 = vld [vmem:[%s1 + $0x18] sm:$0xff]
  %s109 = scalar_lea.vmem %s1, 32
  %v110 = vld [vmem:[%s109] sm:$0xff]
  %v111 = vld [vmem:[%s109 + $0x8] sm:$0xff]
  %v112 = vld [vmem:[%s109 + $0x10] sm:$0xff]
  %v113 = vld [vmem:[%s109 + $0x18] sm:$0xff]
  %s114 = scalar_lea.vmem %s1, 64
  %v115 = vld [vmem:[%s114] sm:$0xff]
  %v116 = vld [vmem:[%s114 + $0x8] sm:$0xff]
  %v117 = vld [vmem:[%s114 + $0x10] sm:$0xff]
  %v118 = vld [vmem:[%s114 + $0x18] sm:$0xff]
  %119 = vrot.lane.b32.xlu0 %v95, 3
  %v120 = vpop.permute.xlu0 %119
  %121 = vrot.lane.b32.xlu0 %v97, 3
  %v122 = vpop.permute.xlu0 %121
  %123 = vrot.lane.b32.xlu0 %v99, 3
  %v124 = vpop.permute.xlu0 %123
  %125 = vrot.lane.b32.xlu0 %v101, 3
  %v126 = vpop.permute.xlu0 %125
  %127 = vrot.lane.b32.xlu0 %v96, 3
  %v128 = vpop.permute.xlu0 %127
  %129 = vrot.lane.b32.xlu0 %v98, 3
  %v130 = vpop.permute.xlu0 %129
  %131 = vrot.lane.b32.xlu0 %v100, 3
  %v132 = vpop.permute.xlu0 %131
  %133 = vrot.lane.b32.xlu0 %v102, 3
  %v134 = vpop.permute.xlu0 %133
  %v135 = vlaneseq
  %v136 = vand.u32 %v135, 127
  %vm137 = vcmp.lt.s32.totalorder %v136, 3
  %v138 = vsel %vm137, %v120, %v128
  %v139 = vsel %vm137, %v122, %v130
  %v140 = vsel %vm137, %v124, %v132
  %v141 = vsel %vm137, %v126, %v134
  %v142 = vsel %vm137, %v128, %v120
  %v143 = vsel %vm137, %v130, %v122
  %v144 = vsel %vm137, %v132, %v124
  %v145 = vsel %vm137, %v134, %v126
  %v147 = vlaneseq
  %v148 = vshrl.u32 %v147, 7
  %v149 = vsub.s32 0, %v148
  %v150 = vrot.slane %v93, %v149
  %v151 = vlaneseq
  %v152 = vshrl.u32 %v151, 7
  %v153 = vsub.s32 1, %v152
  %v154 = vrot.slane %v93, %v153
  %v157 = vmul.f32 %v142, %v150
  %v158 = vmul.f32 %v138, %v154
  %v159 = vmul.f32 %v143, %v150
  %v160 = vmul.f32 %v139, %v154
  %v161 = vmul.f32 %v144, %v150
  %v162 = vmul.f32 %v140, %v154
  %v163 = vmul.f32 %v145, %v150
  %v164 = vmul.f32 %v141, %v154
  %165 = vrot.lane.b32.xlu0 %v95, 125
  %v166 = vpop.permute.xlu0 %165
  %167 = vrot.lane.b32.xlu0 %v97, 125
  %v168 = vpop.permute.xlu0 %167
  %169 = vrot.lane.b32.xlu0 %v99, 125
  %v170 = vpop.permute.xlu0 %169
  %171 = vrot.lane.b32.xlu0 %v101, 125
  %v172 = vpop.permute.xlu0 %171
  %173 = vrot.lane.b32.xlu0 %v96, 125
  %v174 = vpop.permute.xlu0 %173
  %175 = vrot.lane.b32.xlu0 %v98, 125
  %v176 = vpop.permute.xlu0 %175
  %177 = vrot.lane.b32.xlu0 %v100, 125
  %v178 = vpop.permute.xlu0 %177
  %179 = vrot.lane.b32.xlu0 %v102, 125
  %v180 = vpop.permute.xlu0 %179
  %vm181 = vcmp.lt.s32.totalorder %v136, 125
  %v182 = vsel %vm181, %v166, %v174
  %v183 = vsel %vm181, %v168, %v176
  %v184 = vsel %vm181, %v170, %v178
  %v185 = vsel %vm181, %v172, %v180
  %v186 = vsel %vm181, %v174, %v166
  %v187 = vsel %vm181, %v176, %v168
  %v188 = vsel %vm181, %v178, %v170
  %v189 = vsel %vm181, %v180, %v172
  %v191 = vlaneseq
  %v192 = vshrl.u32 %v191, 7
  %v193 = vsub.s32 0, %v192
  %v194 = vrot.slane %v94, %v193
  %v195 = vlaneseq
  %v196 = vshrl.u32 %v195, 7
  %v197 = vsub.s32 1, %v196
  %v198 = vrot.slane %v94, %v197
  %v201 = vmul.f32 %v182, %v194
  %v202 = vmul.f32 %v186, %v198
  %v203 = vmul.f32 %v183, %v194
  %v204 = vmul.f32 %v187, %v198
  %v205 = vmul.f32 %v184, %v194
  %v206 = vmul.f32 %v188, %v198
  %v207 = vmul.f32 %v185, %v194
  %v208 = vmul.f32 %v189, %v198
  %vm209 = vcmask 261120
  %v211 = vsel %vm209, %v110, 0
  %v214 = vsel %vm209, %v111, 0
  %v217 = vsel %vm209, %v112, 0
  %v220 = vsel %vm209, %v113, 0
  %222 = vmatprep.subr.mxu0 %v96
  %223 = vmatpush1.msra.mxu0 %v95
  %224 = vmatprep.subr.mxu0 %v98
  %225 = vmatpush1.msra.mxu0 %v97
  %226 = vmatprep.subr.mxu0 %v100
  %227 = vmatpush1.msra.mxu0 %v99
  %228 = vmatprep.subr.mxu0 %v102
  %229 = vmatpush1.msra.mxu0 %v101
  %230 = vmatprep.subr.mxu0 0.0
  %231 = vmatpush1.msra.mxu0 0.0
  %232 = vmatprep.subr.mxu0 0.0
  %233 = vmatpush1.msra.mxu0 0.0
  %234 = vmatprep.subr.mxu0 0.0
  %235 = vmatpush1.msra.mxu0 0.0
  %236 = vmatprep.subr.mxu0 0.0
  %237 = vmatpush1.msra.mxu0 0.0
  %238 = vmatprep.subr.mxu0 0.0
  %239 = vmatpush1.msra.mxu0 0.0
  %240 = vmatprep.subr.mxu0 0.0
  %241 = vmatpush1.msra.mxu0 0.0
  %242 = vmatprep.subr.mxu0 0.0
  %243 = vmatpush1.msra.mxu0 0.0
  %244 = vmatprep.subr.mxu0 0.0
  %245 = vmatpush1.msra.mxu0 0.0
  %246 = vmatprep.subr.mxu0 0.0
  %247 = vmatpush1.msra.mxu0 0.0
  %248 = vmatprep.subr.mxu0 0.0
  %249 = vmatpush1.msra.mxu0 0.0
  %250 = vmatprep.subr.mxu0 0.0
  %251 = vmatpush1.msra.mxu0 0.0
  %252 = vmatprep.subr.mxu0 0.0
  %253 = vmatpush1.msra.mxu0 0.0
  %254 = vmatprep.subr.mxu0 0.0
  %255 = vmatpush1.msra.mxu0 0.0
  %256 = vmatprep.subr.mxu0 0.0
  %257 = vmatpush1.msra.mxu0 0.0
  %258 = vmatprep.subr.mxu0 0.0
  %259 = vmatpush1.msra.mxu0 0.0
  %260 = vmatprep.subr.mxu0 0.0
  %261 = vmatpush1.msra.mxu0 0.0
  %262 = vmatprep.subr.mxu0 0.0
  %263 = vmatpush1.msra.mxu0 0.0
  %264 = vmatprep.subr.mxu0 0.0
  %265 = vmatpush1.msra.mxu0 0.0
  %266 = vmatprep.subr.mxu0 0.0
  %267 = vmatpush1.msra.mxu0 0.0
  %268 = vmatprep.subr.mxu0 0.0
  %269 = vmatpush1.msra.mxu0 0.0
  %270 = vmatprep.subr.mxu0 0.0
  %271 = vmatpush1.msra.mxu0 0.0
  %272 = vmatprep.subr.mxu0 0.0
  %273 = vmatpush1.msra.mxu0 0.0
  %274 = vmatprep.subr.mxu0 0.0
  %275 = vmatpush1.msra.mxu0 0.0
  %276 = vmatprep.subr.mxu0 0.0
  %277 = vmatpush1.msra.mxu0 0.0
  %278 = vmatprep.subr.mxu0 0.0
  %279 = vmatpush1.msra.mxu0 0.0
  %280 = vmatprep.subr.mxu0 0.0
  %281 = vmatpush1.msra.mxu0 0.0
  %282 = vmatprep.subr.mxu0 0.0
  %283 = vmatpush1.msra.mxu0 0.0
  %284 = vmatprep.subr.mxu0 0.0
  %285 = vmatpush1.msra.mxu0 0.0
  %286 = vmatprep.mubr.f32.mxu0 0.0
  %287 = vmatmul.mubr.f32.gmra.mrb[0].mxu0 %v211
  %v288 = vpop.f32.mrb[0].mxu0
  %v289 = vadd.f32 0.0, %v288
  %v290 = vpop.f32.mrb[0].mxu0
  %v291 = vadd.f32 0.0, %v290
  %292 = vmatprep.mubr.f32.mxu0 0.0
  %293 = vmatmul.mubr.f32.gmra.mrb[0].mxu0 %v214
  %v294 = vpop.f32.mrb[0].mxu0
  %v295 = vadd.f32 0.0, %v294
  %v296 = vpop.f32.mrb[0].mxu0
  %v297 = vadd.f32 0.0, %v296
  %298 = vmatprep.mubr.f32.mxu0 0.0
  %299 = vmatmul.mubr.f32.gmra.mrb[0].mxu0 %v217
  %v300 = vpop.f32.mrb[0].mxu0
  %v301 = vadd.f32 0.0, %v300
  %v302 = vpop.f32.mrb[0].mxu0
  %v303 = vadd.f32 0.0, %v302
  %304 = vmatprep.mubr.f32.mxu0 0.0
  %305 = vmatmul.mubr.f32.gmra.mrb[0].mxu0 %v220
  %v306 = vpop.f32.mrb[0].mxu0
  %v307 = vadd.f32 0.0, %v306
  %v308 = vpop.f32.mrb[0].mxu0
  %v309 = vadd.f32 0.0, %v308
  %310 = vdwg.mxu0
  %v312 = vsel %vm209, %v105, 0
  %v315 = vsel %vm209, %v106, 0
  %v318 = vsel %vm209, %v107, 0
  %v321 = vsel %vm209, %v108, 0
  %323 = vmatprep.subr.mxu0 %v158
  %324 = vmatpush1.msra.mxu0 %v157
  %325 = vmatprep.subr.mxu0 %v160
  %326 = vmatpush1.msra.mxu0 %v159
  %327 = vmatprep.subr.mxu0 %v162
  %328 = vmatpush1.msra.mxu0 %v161
  %329 = vmatprep.subr.mxu0 %v164
  %330 = vmatpush1.msra.mxu0 %v163
  %331 = vmatprep.subr.mxu0 0.0
  %332 = vmatpush1.msra.mxu0 0.0
  %333 = vmatprep.subr.mxu0 0.0
  %334 = vmatpush1.msra.mxu0 0.0
  %335 = vmatprep.subr.mxu0 0.0
  %336 = vmatpush1.msra.mxu0 0.0
  %337 = vmatprep.subr.mxu0 0.0
  %338 = vmatpush1.msra.mxu0 0.0
  %339 = vmatprep.subr.mxu0 0.0
  %340 = vmatpush1.msra.mxu0 0.0
  %341 = vmatprep.subr.mxu0 0.0
  %342 = vmatpush1.msra.mxu0 0.0
  %343 = vmatprep.subr.mxu0 0.0
  %344 = vmatpush1.msra.mxu0 0.0
  %345 = vmatprep.subr.mxu0 0.0
  %346 = vmatpush1.msra.mxu0 0.0
  %347 = vmatprep.subr.mxu0 0.0
  %348 = vmatpush1.msra.mxu0 0.0
  %349 = vmatprep.subr.mxu0 0.0
  %350 = vmatpush1.msra.mxu0 0.0
  %351 = vmatprep.subr.mxu0 0.0
  %352 = vmatpush1.msra.mxu0 0.0
  %353 = vmatprep.subr.mxu0 0.0
  %354 = vmatpush1.msra.mxu0 0.0
  %355 = vmatprep.subr.mxu0 0.0
  %356 = vmatpush1.msra.mxu0 0.0
  %357 = vmatprep.subr.mxu0 0.0
  %358 = vmatpush1.msra.mxu0 0.0
  %359 = vmatprep.subr.mxu0 0.0
  %360 = vmatpush1.msra.mxu0 0.0
  %361 = vmatprep.subr.mxu0 0.0
  %362 = vmatpush1.msra.mxu0 0.0
  %363 = vmatprep.subr.mxu0 0.0
  %364 = vmatpush1.msra.mxu0 0.0
  %365 = vmatprep.subr.mxu0 0.0
  %366 = vmatpush1.msra.mxu0 0.0
  %367 = vmatprep.subr.mxu0 0.0
  %368 = vmatpush1.msra.mxu0 0.0
  %369 = vmatprep.subr.mxu0 0.0
  %370 = vmatpush1.msra.mxu0 0.0
  %371 = vmatprep.subr.mxu0 0.0
  %372 = vmatpush1.msra.mxu0 0.0
  %373 = vmatprep.subr.mxu0 0.0
  %374 = vmatpush1.msra.mxu0 0.0
  %375 = vmatprep.subr.mxu0 0.0
  %376 = vmatpush1.msra.mxu0 0.0
  %377 = vmatprep.subr.mxu0 0.0
  %378 = vmatpush1.msra.mxu0 0.0
  %379 = vmatprep.subr.mxu0 0.0
  %380 = vmatpush1.msra.mxu0 0.0
  %381 = vmatprep.subr.mxu0 0.0
  %382 = vmatpush1.msra.mxu0 0.0
  %383 = vmatprep.subr.mxu0 0.0
  %384 = vmatpush1.msra.mxu0 0.0
  %385 = vmatprep.subr.mxu0 0.0
  %386 = vmatpush1.msra.mxu0 0.0
  %387 = vmatprep.mubr.f32.mxu0 0.0
  %388 = vmatmul.mubr.f32.gmra.mrb[0].mxu0 %v312
  %v389 = vpop.f32.mrb[0].mxu0
  %v390 = vadd.f32 %v289, %v389
  %v391 = vpop.f32.mrb[0].mxu0
  %v392 = vadd.f32 %v291, %v391
  %393 = vmatprep.mubr.f32.mxu0 0.0
  %394 = vmatmul.mubr.f32.gmra.mrb[0].mxu0 %v315
  %v395 = vpop.f32.mrb[0].mxu0
  %v396 = vadd.f32 %v295, %v395
  %v397 = vpop.f32.mrb[0].mxu0
  %v398 = vadd.f32 %v297, %v397
  %399 = vmatprep.mubr.f32.mxu0 0.0
  %400 = vmatmul.mubr.f32.gmra.mrb[0].mxu0 %v318
  %v401 = vpop.f32.mrb[0].mxu0
  %v402 = vadd.f32 %v301, %v401
  %v403 = vpop.f32.mrb[0].mxu0
  %v404 = vadd.f32 %v303, %v403
  %405 = vmatprep.mubr.f32.mxu0 0.0
  %406 = vmatmul.mubr.f32.gmra.mrb[0].mxu0 %v321
  %v407 = vpop.f32.mrb[0].mxu0
  %v408 = vadd.f32 %v307, %v407
  %v409 = vpop.f32.mrb[0].mxu0
  %v410 = vadd.f32 %v309, %v409
  %411 = vdwg.mxu0
  %v413 = vsel %vm209, %v115, 0
  %v416 = vsel %vm209, %v116, 0
  %v419 = vsel %vm209, %v117, 0
  %v422 = vsel %vm209, %v118, 0
  %424 = vmatprep.subr.mxu0 %v202
  %425 = vmatpush1.msra.mxu0 %v201
  %426 = vmatprep.subr.mxu0 %v204
  %427 = vmatpush1.msra.mxu0 %v203
  %428 = vmatprep.subr.mxu0 %v206
  %429 = vmatpush1.msra.mxu0 %v205
  %430 = vmatprep.subr.mxu0 %v208
  %431 = vmatpush1.msra.mxu0 %v207
  %432 = vmatprep.subr.mxu0 0.0
  %433 = vmatpush1.msra.mxu0 0.0
  %434 = vmatprep.subr.mxu0 0.0
  %435 = vmatpush1.msra.mxu0 0.0
  %436 = vmatprep.subr.mxu0 0.0
  %437 = vmatpush1.msra.mxu0 0.0
  %438 = vmatprep.subr.mxu0 0.0
  %439 = vmatpush1.msra.mxu0 0.0
  %440 = vmatprep.subr.mxu0 0.0
  %441 = vmatpush1.msra.mxu0 0.0
  %442 = vmatprep.subr.mxu0 0.0
  %443 = vmatpush1.msra.mxu0 0.0
  %444 = vmatprep.subr.mxu0 0.0
  %445 = vmatpush1.msra.mxu0 0.0
  %446 = vmatprep.subr.mxu0 0.0
  %447 = vmatpush1.msra.mxu0 0.0
  %448 = vmatprep.subr.mxu0 0.0
  %449 = vmatpush1.msra.mxu0 0.0
  %450 = vmatprep.subr.mxu0 0.0
  %451 = vmatpush1.msra.mxu0 0.0
  %452 = vmatprep.subr.mxu0 0.0
  %453 = vmatpush1.msra.mxu0 0.0
  %454 = vmatprep.subr.mxu0 0.0
  %455 = vmatpush1.msra.mxu0 0.0
  %456 = vmatprep.subr.mxu0 0.0
  %457 = vmatpush1.msra.mxu0 0.0
  %458 = vmatprep.subr.mxu0 0.0
  %459 = vmatpush1.msra.mxu0 0.0
  %460 = vmatprep.subr.mxu0 0.0
  %461 = vmatpush1.msra.mxu0 0.0
  %462 = vmatprep.subr.mxu0 0.0
  %463 = vmatpush1.msra.mxu0 0.0
  %464 = vmatprep.subr.mxu0 0.0
  %465 = vmatpush1.msra.mxu0 0.0
  %466 = vmatprep.subr.mxu0 0.0
  %467 = vmatpush1.msra.mxu0 0.0
  %468 = vmatprep.subr.mxu0 0.0
  %469 = vmatpush1.msra.mxu0 0.0
  %470 = vmatprep.subr.mxu0 0.0
  %471 = vmatpush1.msra.mxu0 0.0
  %472 = vmatprep.subr.mxu0 0.0
  %473 = vmatpush1.msra.mxu0 0.0
  %474 = vmatprep.subr.mxu0 0.0
  %475 = vmatpush1.msra.mxu0 0.0
  %476 = vmatprep.subr.mxu0 0.0
  %477 = vmatpush1.msra.mxu0 0.0
  %478 = vmatprep.subr.mxu0 0.0
  %479 = vmatpush1.msra.mxu0 0.0
  %480 = vmatprep.subr.mxu0 0.0
  %481 = vmatpush1.msra.mxu0 0.0
  %482 = vmatprep.subr.mxu0 0.0
  %483 = vmatpush1.msra.mxu0 0.0
  %484 = vmatprep.subr.mxu0 0.0
  %485 = vmatpush1.msra.mxu0 0.0
  %486 = vmatprep.subr.mxu0 0.0
  %487 = vmatpush1.msra.mxu0 0.0
  %488 = vmatprep.mubr.f32.mxu0 0.0
  %489 = vmatmul.mubr.f32.gmra.mrb[0].mxu0 %v413
  %v490 = vpop.f32.mrb[0].mxu0
  %v491 = vadd.f32 0.0, %v490
  %v492 = vpop.f32.mrb[0].mxu0
  %v493 = vadd.f32 0.0, %v492
  %494 = vmatprep.mubr.f32.mxu0 0.0
  %495 = vmatmul.mubr.f32.gmra.mrb[0].mxu0 %v416
  %v496 = vpop.f32.mrb[0].mxu0
  %v497 = vadd.f32 0.0, %v496
  %v498 = vpop.f32.mrb[0].mxu0
  %v499 = vadd.f32 0.0, %v498
  %500 = vmatprep.mubr.f32.mxu0 0.0
  %501 = vmatmul.mubr.f32.gmra.mrb[0].mxu0 %v419
  %v502 = vpop.f32.mrb[0].mxu0
  %v503 = vadd.f32 0.0, %v502
  %v504 = vpop.f32.mrb[0].mxu0
  %v505 = vadd.f32 0.0, %v504
  %506 = vmatprep.mubr.f32.mxu0 0.0
  %507 = vmatmul.mubr.f32.gmra.mrb[0].mxu0 %v422
  %v508 = vpop.f32.mrb[0].mxu0
  %v509 = vadd.f32 0.0, %v508
  %v510 = vpop.f32.mrb[0].mxu0
  %v511 = vadd.f32 0.0, %v510
  %512 = vdwg.mxu0
  %v513 = vadd.f32 %v390, %v491
  %v514 = vadd.f32 %v392, %v493
  %v515 = vadd.f32 %v396, %v497
  %v516 = vadd.f32 %v398, %v499
  %v517 = vadd.f32 %v402, %v503
  %v518 = vadd.f32 %v404, %v505
  %v519 = vadd.f32 %v408, %v509
  %v520 = vadd.f32 %v410, %v511
  %v521 = vmul.f32 %v513, %v513
  %v522 = vmul.f32 %v514, %v514
  %v523 = vmul.f32 %v515, %v515
  %v524 = vmul.f32 %v516, %v516
  %v525 = vmul.f32 %v517, %v517
  %v526 = vmul.f32 %v518, %v518
  %v527 = vmul.f32 %v519, %v519
  %v528 = vmul.f32 %v520, %v520
  %529 = vmatprep.subr.mxu0 %v30
  %530 = vmatpush1.msra.mxu0 %v29
  %531 = vmatprep.subr.mxu0 %v32
  %532 = vmatpush1.msra.mxu0 %v31
  %533 = vmatprep.subr.mxu0 %v34
  %534 = vmatpush1.msra.mxu0 %v33
  %535 = vmatprep.subr.mxu0 %v36
  %536 = vmatpush1.msra.mxu0 %v35
  %537 = vmatprep.subr.mxu0 %v38
  %538 = vmatpush1.msra.mxu0 %v37
  %539 = vmatprep.subr.mxu0 %v40
  %540 = vmatpush1.msra.mxu0 %v39
  %541 = vmatprep.subr.mxu0 %v42
  %542 = vmatpush1.msra.mxu0 %v41
  %543 = vmatprep.subr.mxu0 %v44
  %544 = vmatpush1.msra.mxu0 %v43
  %545 = vmatprep.subr.mxu0 %v46
  %546 = vmatpush1.msra.mxu0 %v45
  %547 = vmatprep.subr.mxu0 %v48
  %548 = vmatpush1.msra.mxu0 %v47
  %549 = vmatprep.subr.mxu0 %v50
  %550 = vmatpush1.msra.mxu0 %v49
  %551 = vmatprep.subr.mxu0 %v52
  %552 = vmatpush1.msra.mxu0 %v51
  %553 = vmatprep.subr.mxu0 %v54
  %554 = vmatpush1.msra.mxu0 %v53
  %555 = vmatprep.subr.mxu0 %v56
  %556 = vmatpush1.msra.mxu0 %v55
  %557 = vmatprep.subr.mxu0 %v58
  %558 = vmatpush1.msra.mxu0 %v57
  %559 = vmatprep.subr.mxu0 %v60
  %560 = vmatpush1.msra.mxu0 %v59
  %561 = vmatprep.subr.mxu0 %v62
  %562 = vmatpush1.msra.mxu0 %v61
  %563 = vmatprep.subr.mxu0 %v64
  %564 = vmatpush1.msra.mxu0 %v63
  %565 = vmatprep.subr.mxu0 %v66
  %566 = vmatpush1.msra.mxu0 %v65
  %567 = vmatprep.subr.mxu0 %v68
  %568 = vmatpush1.msra.mxu0 %v67
  %569 = vmatprep.subr.mxu0 %v70
  %570 = vmatpush1.msra.mxu0 %v69
  %571 = vmatprep.subr.mxu0 %v72
  %572 = vmatpush1.msra.mxu0 %v71
  %573 = vmatprep.subr.mxu0 %v74
  %574 = vmatpush1.msra.mxu0 %v73
  %575 = vmatprep.subr.mxu0 %v76
  %576 = vmatpush1.msra.mxu0 %v75
  %577 = vmatprep.subr.mxu0 %v78
  %578 = vmatpush1.msra.mxu0 %v77
  %579 = vmatprep.subr.mxu0 %v80
  %580 = vmatpush1.msra.mxu0 %v79
  %581 = vmatprep.subr.mxu0 %v82
  %582 = vmatpush1.msra.mxu0 %v81
  %583 = vmatprep.subr.mxu0 %v84
  %584 = vmatpush1.msra.mxu0 %v83
  %585 = vmatprep.subr.mxu0 %v86
  %586 = vmatpush1.msra.mxu0 %v85
  %587 = vmatprep.subr.mxu0 %v88
  %588 = vmatpush1.msra.mxu0 %v87
  %589 = vmatprep.subr.mxu0 %v90
  %590 = vmatpush1.msra.mxu0 %v89
  %591 = vmatprep.subr.mxu0 %v92
  %592 = vmatpush1.msra.mxu0 %v91
  %593 = vmatprep.mubr.f32.mxu0 %v514
  %594 = vmatmul.mubr.f32.gmra.mrb[0].mxu0 %v513
  %v595 = vpop.f32.mrb[0].mxu0
  %v596 = vadd.f32 0.0, %v595
  %v597 = vpop.f32.mrb[0].mxu0
  %v598 = vadd.f32 0.0, %v597
  %599 = vmatprep.mubr.f32.mxu0 %v516
  %600 = vmatmul.mubr.f32.gmra.mrb[0].mxu0 %v515
  %v601 = vpop.f32.mrb[0].mxu0
  %v602 = vadd.f32 0.0, %v601
  %v603 = vpop.f32.mrb[0].mxu0
  %v604 = vadd.f32 0.0, %v603
  %605 = vmatprep.mubr.f32.mxu0 %v518
  %606 = vmatmul.mubr.f32.gmra.mrb[0].mxu0 %v517
  %v607 = vpop.f32.mrb[0].mxu0
  %v608 = vadd.f32 0.0, %v607
  %v609 = vpop.f32.mrb[0].mxu0
  %v610 = vadd.f32 0.0, %v609
  %611 = vmatprep.mubr.f32.mxu0 %v520
  %612 = vmatmul.mubr.f32.gmra.mrb[0].mxu0 %v519
  %v613 = vpop.f32.mrb[0].mxu0
  %v614 = vadd.f32 0.0, %v613
  %v615 = vpop.f32.mrb[0].mxu0
  %v616 = vadd.f32 0.0, %v615
  %617 = vmatprep.mubr.f32.mxu0 %v522
  %618 = vmatmul.mubr.f32.gmra.mrb[0].mxu0 %v521
  %v619 = vpop.f32.mrb[0].mxu0
  %v620 = vadd.f32 0.0, %v619
  %v621 = vpop.f32.mrb[0].mxu0
  %v622 = vadd.f32 0.0, %v621
  %623 = vmatprep.mubr.f32.mxu0 %v524
  %624 = vmatmul.mubr.f32.gmra.mrb[0].mxu0 %v523
  %v625 = vpop.f32.mrb[0].mxu0
  %v626 = vadd.f32 0.0, %v625
  %v627 = vpop.f32.mrb[0].mxu0
  %v628 = vadd.f32 0.0, %v627
  %629 = vmatprep.mubr.f32.mxu0 %v526
  %630 = vmatmul.mubr.f32.gmra.mrb[0].mxu0 %v525
  %v631 = vpop.f32.mrb[0].mxu0
  %v632 = vadd.f32 0.0, %v631
  %v633 = vpop.f32.mrb[0].mxu0
  %v634 = vadd.f32 0.0, %v633
  %635 = vmatprep.mubr.f32.mxu0 %v528
  %636 = vmatmul.mubr.f32.gmra.mrb[0].mxu0 %v527
  %v637 = vpop.f32.mrb[0].mxu0
  %v638 = vadd.f32 0.0, %v637
  %v639 = vpop.f32.mrb[0].mxu0
  %v640 = vadd.f32 0.0, %v639
  %641 = vdwg.mxu0
  %v642 = vmul.f32 %v596, %v596
  %v643 = vmul.f32 %v598, %v598
  %v644 = vmul.f32 %v602, %v602
  %v645 = vmul.f32 %v604, %v604
  %v646 = vmul.f32 %v608, %v608
  %v647 = vmul.f32 %v610, %v610
  %v648 = vmul.f32 %v614, %v614
  %v649 = vmul.f32 %v616, %v616
  %v650 = vsub.f32 %v620, %v642
  %v651 = vsub.f32 %v622, %v643
  %v652 = vsub.f32 %v626, %v644
  %v653 = vsub.f32 %v628, %v645
  %v654 = vsub.f32 %v632, %v646
  %v655 = vsub.f32 %v634, %v647
  %v656 = vsub.f32 %v638, %v648
  %v657 = vsub.f32 %v640, %v649
  %v658 = vsub.f32 %v513, %v596
  %v659 = vsub.f32 %v514, %v598
  %v660 = vsub.f32 %v515, %v602
  %v661 = vsub.f32 %v516, %v604
  %v662 = vsub.f32 %v517, %v608
  %v663 = vsub.f32 %v518, %v610
  %v664 = vsub.f32 %v519, %v614
  %v665 = vsub.f32 %v520, %v616
  %v666 = vadd.f32 %v650, 1e-05
  %v667 = vadd.f32 %v651, 1e-05
  %v668 = vadd.f32 %v652, 1e-05
  %v669 = vadd.f32 %v653, 1e-05
  %v670 = vadd.f32 %v654, 1e-05
  %v671 = vadd.f32 %v655, 1e-05
  %v672 = vadd.f32 %v656, 1e-05
  %v673 = vadd.f32 %v657, 1e-05
  %v674 = vrsqrt.pop %v666
  %v675 = vrsqrt.pop %v667
  %v676 = vrsqrt.pop %v668
  %v677 = vrsqrt.pop %v669
  %v678 = vrsqrt.pop %v670
  %v679 = vrsqrt.pop %v671
  %v680 = vrsqrt.pop %v672
  %v681 = vrsqrt.pop %v673
  %v682 = vmul.f32 %v658, %v674
  %v683 = vmul.f32 %v659, %v675
  %v684 = vmul.f32 %v660, %v676
  %v685 = vmul.f32 %v661, %v677
  %v686 = vmul.f32 %v662, %v678
  %v687 = vmul.f32 %v663, %v679
  %v688 = vmul.f32 %v664, %v680
  %v689 = vmul.f32 %v665, %v681
  %v691 = vlaneseq
  %v692 = vshrl.u32 %v691, 7
  %v693 = vsub.s32 0, %v692
  %v694 = vrot.slane %v103, %v693
  %v695 = vlaneseq
  %v696 = vshrl.u32 %v695, 7
  %v697 = vsub.s32 1, %v696
  %v698 = vrot.slane %v103, %v697
  %v701 = vmul.f32 %v682, %v694
  %v702 = vmul.f32 %v683, %v698
  %v703 = vmul.f32 %v684, %v694
  %v704 = vmul.f32 %v685, %v698
  %v705 = vmul.f32 %v686, %v694
  %v706 = vmul.f32 %v687, %v698
  %v707 = vmul.f32 %v688, %v694
  %v708 = vmul.f32 %v689, %v698
  %v710 = vlaneseq
  %v711 = vshrl.u32 %v710, 7
  %v712 = vsub.s32 0, %v711
  %v713 = vrot.slane %v104, %v712
  %v714 = vlaneseq
  %v715 = vshrl.u32 %v714, 7
  %v716 = vsub.s32 1, %v715
  %v717 = vrot.slane %v104, %v716
  %v720 = vadd.f32 %v701, %v713
  %v721 = vadd.f32 %v702, %v717
  %v722 = vadd.f32 %v703, %v713
  %v723 = vadd.f32 %v704, %v717
  %v724 = vadd.f32 %v705, %v713
  %v725 = vadd.f32 %v706, %v717
  %v726 = vadd.f32 %v707, %v713
  %v727 = vadd.f32 %v708, %v717
  %v728 = vmax.f32 %v720, 0.0
  %v729 = vmax.f32 %v721, 0.0
  %v730 = vmax.f32 %v722, 0.0
  %v731 = vmax.f32 %v723, 0.0
  %v732 = vmax.f32 %v724, 0.0
  %v733 = vmax.f32 %v725, 0.0
  %v734 = vmax.f32 %v726, 0.0
  %v735 = vmax.f32 %v727, 0.0
  %v736 = vld [vmem:[%s2] sm:$0xff]
  %v737 = vld [vmem:[%s2 + $0x8] sm:$0xff]
  %v738 = vld [vmem:[%s2 + $0x10] sm:$0xff]
  %v739 = vld [vmem:[%s2 + $0x18] sm:$0xff]
  %s740 = scalar_lea.vmem %s2, 32
  %v741 = vld [vmem:[%s740] sm:$0xff]
  %v742 = vld [vmem:[%s740 + $0x8] sm:$0xff]
  %v743 = vld [vmem:[%s740 + $0x10] sm:$0xff]
  %v744 = vld [vmem:[%s740 + $0x18] sm:$0xff]
  %s745 = scalar_lea.vmem %s2, 64
  %v746 = vld [vmem:[%s745] sm:$0xff]
  %v747 = vld [vmem:[%s745 + $0x8] sm:$0xff]
  %v748 = vld [vmem:[%s745 + $0x10] sm:$0xff]
  %v749 = vld [vmem:[%s745 + $0x18] sm:$0xff]
  %750 = vrot.lane.b32.xlu0 %v728, 3
  %v751 = vpop.permute.xlu0 %750
  %752 = vrot.lane.b32.xlu0 %v730, 3
  %v753 = vpop.permute.xlu0 %752
  %754 = vrot.lane.b32.xlu0 %v732, 3
  %v755 = vpop.permute.xlu0 %754
  %756 = vrot.lane.b32.xlu0 %v734, 3
  %v757 = vpop.permute.xlu0 %756
  %758 = vrot.lane.b32.xlu0 %v729, 3
  %v759 = vpop.permute.xlu0 %758
  %760 = vrot.lane.b32.xlu0 %v731, 3
  %v761 = vpop.permute.xlu0 %760
  %762 = vrot.lane.b32.xlu0 %v733, 3
  %v763 = vpop.permute.xlu0 %762
  %764 = vrot.lane.b32.xlu0 %v735, 3
  %v765 = vpop.permute.xlu0 %764
  %v766 = vsel %vm137, %v751, %v759
  %v767 = vsel %vm137, %v753, %v761
  %v768 = vsel %vm137, %v755, %v763
  %v769 = vsel %vm137, %v757, %v765
  %v770 = vsel %vm137, %v759, %v751
  %v771 = vsel %vm137, %v761, %v753
  %v772 = vsel %vm137, %v763, %v755
  %v773 = vsel %vm137, %v765, %v757
  %v774 = vmul.f32 %v770, %v150
  %v775 = vmul.f32 %v766, %v154
  %v776 = vmul.f32 %v771, %v150
  %v777 = vmul.f32 %v767, %v154
  %v778 = vmul.f32 %v772, %v150
  %v779 = vmul.f32 %v768, %v154
  %v780 = vmul.f32 %v773, %v150
  %v781 = vmul.f32 %v769, %v154
  %782 = vrot.lane.b32.xlu0 %v728, 125
  %v783 = vpop.permute.xlu0 %782
  %784 = vrot.lane.b32.xlu0 %v730, 125
  %v785 = vpop.permute.xlu0 %784
  %786 = vrot.lane.b32.xlu0 %v732, 125
  %v787 = vpop.permute.xlu0 %786
  %788 = vrot.lane.b32.xlu0 %v734, 125
  %v789 = vpop.permute.xlu0 %788
  %790 = vrot.lane.b32.xlu0 %v729, 125
  %v791 = vpop.permute.xlu0 %790
  %792 = vrot.lane.b32.xlu0 %v731, 125
  %v793 = vpop.permute.xlu0 %792
  %794 = vrot.lane.b32.xlu0 %v733, 125
  %v795 = vpop.permute.xlu0 %794
  %796 = vrot.lane.b32.xlu0 %v735, 125
  %v797 = vpop.permute.xlu0 %796
  %v798 = vsel %vm181, %v783, %v791
  %v799 = vsel %vm181, %v785, %v793
  %v800 = vsel %vm181, %v787, %v795
  %v801 = vsel %vm181, %v789, %v797
  %v802 = vsel %vm181, %v791, %v783
  %v803 = vsel %vm181, %v793, %v785
  %v804 = vsel %vm181, %v795, %v787
  %v805 = vsel %vm181, %v797, %v789
  %v806 = vmul.f32 %v798, %v194
  %v807 = vmul.f32 %v802, %v198
  %v808 = vmul.f32 %v799, %v194
  %v809 = vmul.f32 %v803, %v198
  %v810 = vmul.f32 %v800, %v194
  %v811 = vmul.f32 %v804, %v198
  %v812 = vmul.f32 %v801, %v194
  %v813 = vmul.f32 %v805, %v198
  %v815 = vsel %vm209, %v741, 0
  %v818 = vsel %vm209, %v742, 0
  %v821 = vsel %vm209, %v743, 0
  %v824 = vsel %vm209, %v744, 0
  %826 = vmatprep.subr.mxu0 %v729
  %827 = vmatpush1.msra.mxu0 %v728
  %828 = vmatprep.subr.mxu0 %v731
  %829 = vmatpush1.msra.mxu0 %v730
  %830 = vmatprep.subr.mxu0 %v733
  %831 = vmatpush1.msra.mxu0 %v732
  %832 = vmatprep.subr.mxu0 %v735
  %833 = vmatpush1.msra.mxu0 %v734
  %834 = vmatprep.subr.mxu0 0.0
  %835 = vmatpush1.msra.mxu0 0.0
  %836 = vmatprep.subr.mxu0 0.0
  %837 = vmatpush1.msra.mxu0 0.0
  %838 = vmatprep.subr.mxu0 0.0
  %839 = vmatpush1.msra.mxu0 0.0
  %840 = vmatprep.subr.mxu0 0.0
  %841 = vmatpush1.msra.mxu0 0.0
  %842 = vmatprep.subr.mxu0 0.0
  %843 = vmatpush1.msra.mxu0 0.0
  %844 = vmatprep.subr.mxu0 0.0
  %845 = vmatpush1.msra.mxu0 0.0
  %846 = vmatprep.subr.mxu0 0.0
  %847 = vmatpush1.msra.mxu0 0.0
  %848 = vmatprep.subr.mxu0 0.0
  %849 = vmatpush1.msra.mxu0 0.0
  %850 = vmatprep.subr.mxu0 0.0
  %851 = vmatpush1.msra.mxu0 0.0
  %852 = vmatprep.subr.mxu0 0.0
  %853 = vmatpush1.msra.mxu0 0.0
  %854 = vmatprep.subr.mxu0 0.0
  %855 = vmatpush1.msra.mxu0 0.0
  %856 = vmatprep.subr.mxu0 0.0
  %857 = vmatpush1.msra.mxu0 0.0
  %858 = vmatprep.subr.mxu0 0.0
  %859 = vmatpush1.msra.mxu0 0.0
  %860 = vmatprep.subr.mxu0 0.0
  %861 = vmatpush1.msra.mxu0 0.0
  %862 = vmatprep.subr.mxu0 0.0
  %863 = vmatpush1.msra.mxu0 0.0
  %864 = vmatprep.subr.mxu0 0.0
  %865 = vmatpush1.msra.mxu0 0.0
  %866 = vmatprep.subr.mxu0 0.0
  %867 = vmatpush1.msra.mxu0 0.0
  %868 = vmatprep.subr.mxu0 0.0
  %869 = vmatpush1.msra.mxu0 0.0
  %870 = vmatprep.subr.mxu0 0.0
  %871 = vmatpush1.msra.mxu0 0.0
  %872 = vmatprep.subr.mxu0 0.0
  %873 = vmatpush1.msra.mxu0 0.0
  %874 = vmatprep.subr.mxu0 0.0
  %875 = vmatpush1.msra.mxu0 0.0
  %876 = vmatprep.subr.mxu0 0.0
  %877 = vmatpush1.msra.mxu0 0.0
  %878 = vmatprep.subr.mxu0 0.0
  %879 = vmatpush1.msra.mxu0 0.0
  %880 = vmatprep.subr.mxu0 0.0
  %881 = vmatpush1.msra.mxu0 0.0
  %882 = vmatprep.subr.mxu0 0.0
  %883 = vmatpush1.msra.mxu0 0.0
  %884 = vmatprep.subr.mxu0 0.0
  %885 = vmatpush1.msra.mxu0 0.0
  %886 = vmatprep.subr.mxu0 0.0
  %887 = vmatpush1.msra.mxu0 0.0
  %888 = vmatprep.subr.mxu0 0.0
  %889 = vmatpush1.msra.mxu0 0.0
  %890 = vmatprep.mubr.f32.mxu0 0.0
  %891 = vmatmul.mubr.f32.gmra.mrb[0].mxu0 %v815
  %v892 = vpop.f32.mrb[0].mxu0
  %v893 = vadd.f32 0.0, %v892
  %v894 = vpop.f32.mrb[0].mxu0
  %v895 = vadd.f32 0.0, %v894
  %896 = vmatprep.mubr.f32.mxu0 0.0
  %897 = vmatmul.mubr.f32.gmra.mrb[0].mxu0 %v818
  %v898 = vpop.f32.mrb[0].mxu0
  %v899 = vadd.f32 0.0, %v898
  %v900 = vpop.f32.mrb[0].mxu0
  %v901 = vadd.f32 0.0, %v900
  %902 = vmatprep.mubr.f32.mxu0 0.0
  %903 = vmatmul.mubr.f32.gmra.mrb[0].mxu0 %v821
  %v904 = vpop.f32.mrb[0].mxu0
  %v905 = vadd.f32 0.0, %v904
  %v906 = vpop.f32.mrb[0].mxu0
  %v907 = vadd.f32 0.0, %v906
  %908 = vmatprep.mubr.f32.mxu0 0.0
  %909 = vmatmul.mubr.f32.gmra.mrb[0].mxu0 %v824
  %v910 = vpop.f32.mrb[0].mxu0
  %v911 = vadd.f32 0.0, %v910
  %v912 = vpop.f32.mrb[0].mxu0
  %v913 = vadd.f32 0.0, %v912
  %914 = vdwg.mxu0
  %v916 = vsel %vm209, %v736, 0
  %v919 = vsel %vm209, %v737, 0
  %v922 = vsel %vm209, %v738, 0
  %v925 = vsel %vm209, %v739, 0
  %927 = vmatprep.subr.mxu0 %v775
  %928 = vmatpush1.msra.mxu0 %v774
  %929 = vmatprep.subr.mxu0 %v777
  %930 = vmatpush1.msra.mxu0 %v776
  %931 = vmatprep.subr.mxu0 %v779
  %932 = vmatpush1.msra.mxu0 %v778
  %933 = vmatprep.subr.mxu0 %v781
  %934 = vmatpush1.msra.mxu0 %v780
  %935 = vmatprep.subr.mxu0 0.0
  %936 = vmatpush1.msra.mxu0 0.0
  %937 = vmatprep.subr.mxu0 0.0
  %938 = vmatpush1.msra.mxu0 0.0
  %939 = vmatprep.subr.mxu0 0.0
  %940 = vmatpush1.msra.mxu0 0.0
  %941 = vmatprep.subr.mxu0 0.0
  %942 = vmatpush1.msra.mxu0 0.0
  %943 = vmatprep.subr.mxu0 0.0
  %944 = vmatpush1.msra.mxu0 0.0
  %945 = vmatprep.subr.mxu0 0.0
  %946 = vmatpush1.msra.mxu0 0.0
  %947 = vmatprep.subr.mxu0 0.0
  %948 = vmatpush1.msra.mxu0 0.0
  %949 = vmatprep.subr.mxu0 0.0
  %950 = vmatpush1.msra.mxu0 0.0
  %951 = vmatprep.subr.mxu0 0.0
  %952 = vmatpush1.msra.mxu0 0.0
  %953 = vmatprep.subr.mxu0 0.0
  %954 = vmatpush1.msra.mxu0 0.0
  %955 = vmatprep.subr.mxu0 0.0
  %956 = vmatpush1.msra.mxu0 0.0
  %957 = vmatprep.subr.mxu0 0.0
  %958 = vmatpush1.msra.mxu0 0.0
  %959 = vmatprep.subr.mxu0 0.0
  %960 = vmatpush1.msra.mxu0 0.0
  %961 = vmatprep.subr.mxu0 0.0
  %962 = vmatpush1.msra.mxu0 0.0
  %963 = vmatprep.subr.mxu0 0.0
  %964 = vmatpush1.msra.mxu0 0.0
  %965 = vmatprep.subr.mxu0 0.0
  %966 = vmatpush1.msra.mxu0 0.0
  %967 = vmatprep.subr.mxu0 0.0
  %968 = vmatpush1.msra.mxu0 0.0
  %969 = vmatprep.subr.mxu0 0.0
  %970 = vmatpush1.msra.mxu0 0.0
  %971 = vmatprep.subr.mxu0 0.0
  %972 = vmatpush1.msra.mxu0 0.0
  %973 = vmatprep.subr.mxu0 0.0
  %974 = vmatpush1.msra.mxu0 0.0
  %975 = vmatprep.subr.mxu0 0.0
  %976 = vmatpush1.msra.mxu0 0.0
  %977 = vmatprep.subr.mxu0 0.0
  %978 = vmatpush1.msra.mxu0 0.0
  %979 = vmatprep.subr.mxu0 0.0
  %980 = vmatpush1.msra.mxu0 0.0
  %981 = vmatprep.subr.mxu0 0.0
  %982 = vmatpush1.msra.mxu0 0.0
  %983 = vmatprep.subr.mxu0 0.0
  %984 = vmatpush1.msra.mxu0 0.0
  %985 = vmatprep.subr.mxu0 0.0
  %986 = vmatpush1.msra.mxu0 0.0
  %987 = vmatprep.subr.mxu0 0.0
  %988 = vmatpush1.msra.mxu0 0.0
  %989 = vmatprep.subr.mxu0 0.0
  %990 = vmatpush1.msra.mxu0 0.0
  %991 = vmatprep.mubr.f32.mxu0 0.0
  %992 = vmatmul.mubr.f32.gmra.mrb[0].mxu0 %v916
  %v993 = vpop.f32.mrb[0].mxu0
  %v994 = vadd.f32 %v893, %v993
  %v995 = vpop.f32.mrb[0].mxu0
  %v996 = vadd.f32 %v895, %v995
  %997 = vmatprep.mubr.f32.mxu0 0.0
  %998 = vmatmul.mubr.f32.gmra.mrb[0].mxu0 %v919
  %v999 = vpop.f32.mrb[0].mxu0
  %v1000 = vadd.f32 %v899, %v999
  %v1001 = vpop.f32.mrb[0].mxu0
  %v1002 = vadd.f32 %v901, %v1001
  %1003 = vmatprep.mubr.f32.mxu0 0.0
  %1004 = vmatmul.mubr.f32.gmra.mrb[0].mxu0 %v922
  %v1005 = vpop.f32.mrb[0].mxu0
  %v1006 = vadd.f32 %v905, %v1005
  %v1007 = vpop.f32.mrb[0].mxu0
  %v1008 = vadd.f32 %v907, %v1007
  %1009 = vmatprep.mubr.f32.mxu0 0.0
  %1010 = vmatmul.mubr.f32.gmra.mrb[0].mxu0 %v925
  %v1011 = vpop.f32.mrb[0].mxu0
  %v1012 = vadd.f32 %v911, %v1011
  %v1013 = vpop.f32.mrb[0].mxu0
  %v1014 = vadd.f32 %v913, %v1013
  %1015 = vdwg.mxu0
  %v1017 = vsel %vm209, %v746, 0
  %v1020 = vsel %vm209, %v747, 0
  %v1023 = vsel %vm209, %v748, 0
  %v1026 = vsel %vm209, %v749, 0
  %1028 = vmatprep.subr.mxu0 %v807
  %1029 = vmatpush1.msra.mxu0 %v806
  %1030 = vmatprep.subr.mxu0 %v809
  %1031 = vmatpush1.msra.mxu0 %v808
  %1032 = vmatprep.subr.mxu0 %v811
  %1033 = vmatpush1.msra.mxu0 %v810
  %1034 = vmatprep.subr.mxu0 %v813
  %1035 = vmatpush1.msra.mxu0 %v812
  %1036 = vmatprep.subr.mxu0 0.0
  %1037 = vmatpush1.msra.mxu0 0.0
  %1038 = vmatprep.subr.mxu0 0.0
  %1039 = vmatpush1.msra.mxu0 0.0
  %1040 = vmatprep.subr.mxu0 0.0
  %1041 = vmatpush1.msra.mxu0 0.0
  %1042 = vmatprep.subr.mxu0 0.0
  %1043 = vmatpush1.msra.mxu0 0.0
  %1044 = vmatprep.subr.mxu0 0.0
  %1045 = vmatpush1.msra.mxu0 0.0
  %1046 = vmatprep.subr.mxu0 0.0
  %1047 = vmatpush1.msra.mxu0 0.0
  %1048 = vmatprep.subr.mxu0 0.0
  %1049 = vmatpush1.msra.mxu0 0.0
  %1050 = vmatprep.subr.mxu0 0.0
  %1051 = vmatpush1.msra.mxu0 0.0
  %1052 = vmatprep.subr.mxu0 0.0
  %1053 = vmatpush1.msra.mxu0 0.0
  %1054 = vmatprep.subr.mxu0 0.0
  %1055 = vmatpush1.msra.mxu0 0.0
  %1056 = vmatprep.subr.mxu0 0.0
  %1057 = vmatpush1.msra.mxu0 0.0
  %1058 = vmatprep.subr.mxu0 0.0
  %1059 = vmatpush1.msra.mxu0 0.0
  %1060 = vmatprep.subr.mxu0 0.0
  %1061 = vmatpush1.msra.mxu0 0.0
  %1062 = vmatprep.subr.mxu0 0.0
  %1063 = vmatpush1.msra.mxu0 0.0
  %1064 = vmatprep.subr.mxu0 0.0
  %1065 = vmatpush1.msra.mxu0 0.0
  %1066 = vmatprep.subr.mxu0 0.0
  %1067 = vmatpush1.msra.mxu0 0.0
  %1068 = vmatprep.subr.mxu0 0.0
  %1069 = vmatpush1.msra.mxu0 0.0
  %1070 = vmatprep.subr.mxu0 0.0
  %1071 = vmatpush1.msra.mxu0 0.0
  %1072 = vmatprep.subr.mxu0 0.0
  %1073 = vmatpush1.msra.mxu0 0.0
  %1074 = vmatprep.subr.mxu0 0.0
  %1075 = vmatpush1.msra.mxu0 0.0
  %1076 = vmatprep.subr.mxu0 0.0
  %1077 = vmatpush1.msra.mxu0 0.0
  %1078 = vmatprep.subr.mxu0 0.0
  %1079 = vmatpush1.msra.mxu0 0.0
  %1080 = vmatprep.subr.mxu0 0.0
  %1081 = vmatpush1.msra.mxu0 0.0
  %1082 = vmatprep.subr.mxu0 0.0
  %1083 = vmatpush1.msra.mxu0 0.0
  %1084 = vmatprep.subr.mxu0 0.0
  %1085 = vmatpush1.msra.mxu0 0.0
  %1086 = vmatprep.subr.mxu0 0.0
  %1087 = vmatpush1.msra.mxu0 0.0
  %1088 = vmatprep.subr.mxu0 0.0
  %1089 = vmatpush1.msra.mxu0 0.0
  %1090 = vmatprep.subr.mxu0 0.0
  %1091 = vmatpush1.msra.mxu0 0.0
  %1092 = vmatprep.mubr.f32.mxu0 0.0
  %1093 = vmatmul.mubr.f32.gmra.mrb[0].mxu0 %v1017
  %v1094 = vpop.f32.mrb[0].mxu0
  %v1095 = vadd.f32 0.0, %v1094
  %v1096 = vpop.f32.mrb[0].mxu0
  %v1097 = vadd.f32 0.0, %v1096
  %1098 = vmatprep.mubr.f32.mxu0 0.0
  %1099 = vmatmul.mubr.f32.gmra.mrb[0].mxu0 %v1020
  %v1100 = vpop.f32.mrb[0].mxu0
  %v1101 = vadd.f32 0.0, %v1100
  %v1102 = vpop.f32.mrb[0].mxu0
  %v1103 = vadd.f32 0.0, %v1102
  %1104 = vmatprep.mubr.f32.mxu0 0.0
  %1105 = vmatmul.mubr.f32.gmra.mrb[0].mxu0 %v1023
  %v1106 = vpop.f32.mrb[0].mxu0
  %v1107 = vadd.f32 0.0, %v1106
  %v1108 = vpop.f32.mrb[0].mxu0
  %v1109 = vadd.f32 0.0, %v1108
  %1110 = vmatprep.mubr.f32.mxu0 0.0
  %1111 = vmatmul.mubr.f32.gmra.mrb[0].mxu0 %v1026
  %v1112 = vpop.f32.mrb[0].mxu0
  %v1113 = vadd.f32 0.0, %v1112
  %v1114 = vpop.f32.mrb[0].mxu0
  %v1115 = vadd.f32 0.0, %v1114
  %1116 = vdwg.mxu0
  %v1117 = vadd.f32 %v994, %v1095
  %v1118 = vadd.f32 %v996, %v1097
  %v1119 = vadd.f32 %v1000, %v1101
  %v1120 = vadd.f32 %v1002, %v1103
  %v1121 = vadd.f32 %v1006, %v1107
  %v1122 = vadd.f32 %v1008, %v1109
  %v1123 = vadd.f32 %v1012, %v1113
  %v1124 = vadd.f32 %v1014, %v1115
  %v1125 = vmul.f32 %v1117, %v1117
  %v1126 = vmul.f32 %v1118, %v1118
  %v1127 = vmul.f32 %v1119, %v1119
  %v1128 = vmul.f32 %v1120, %v1120
  %v1129 = vmul.f32 %v1121, %v1121
  %v1130 = vmul.f32 %v1122, %v1122
  %v1131 = vmul.f32 %v1123, %v1123
  %v1132 = vmul.f32 %v1124, %v1124
  %1133 = vmatprep.subr.mxu0 %v30
  %1134 = vmatpush1.msra.mxu0 %v29
  %1135 = vmatprep.subr.mxu0 %v32
  %1136 = vmatpush1.msra.mxu0 %v31
  %1137 = vmatprep.subr.mxu0 %v34
  %1138 = vmatpush1.msra.mxu0 %v33
  %1139 = vmatprep.subr.mxu0 %v36
  %1140 = vmatpush1.msra.mxu0 %v35
  %1141 = vmatprep.subr.mxu0 %v38
  %1142 = vmatpush1.msra.mxu0 %v37
  %1143 = vmatprep.subr.mxu0 %v40
  %1144 = vmatpush1.msra.mxu0 %v39
  %1145 = vmatprep.subr.mxu0 %v42
  %1146 = vmatpush1.msra.mxu0 %v41
  %1147 = vmatprep.subr.mxu0 %v44
  %1148 = vmatpush1.msra.mxu0 %v43
  %1149 = vmatprep.subr.mxu0 %v46
  %1150 = vmatpush1.msra.mxu0 %v45
  %1151 = vmatprep.subr.mxu0 %v48
  %1152 = vmatpush1.msra.mxu0 %v47
  %1153 = vmatprep.subr.mxu0 %v50
  %1154 = vmatpush1.msra.mxu0 %v49
  %1155 = vmatprep.subr.mxu0 %v52
  %1156 = vmatpush1.msra.mxu0 %v51
  %1157 = vmatprep.subr.mxu0 %v54
  %1158 = vmatpush1.msra.mxu0 %v53
  %1159 = vmatprep.subr.mxu0 %v56
  %1160 = vmatpush1.msra.mxu0 %v55
  %1161 = vmatprep.subr.mxu0 %v58
  %1162 = vmatpush1.msra.mxu0 %v57
  %1163 = vmatprep.subr.mxu0 %v60
  %1164 = vmatpush1.msra.mxu0 %v59
  %1165 = vmatprep.subr.mxu0 %v62
  %1166 = vmatpush1.msra.mxu0 %v61
  %1167 = vmatprep.subr.mxu0 %v64
  %1168 = vmatpush1.msra.mxu0 %v63
  %1169 = vmatprep.subr.mxu0 %v66
  %1170 = vmatpush1.msra.mxu0 %v65
  %1171 = vmatprep.subr.mxu0 %v68
  %1172 = vmatpush1.msra.mxu0 %v67
  %1173 = vmatprep.subr.mxu0 %v70
  %1174 = vmatpush1.msra.mxu0 %v69
  %1175 = vmatprep.subr.mxu0 %v72
  %1176 = vmatpush1.msra.mxu0 %v71
  %1177 = vmatprep.subr.mxu0 %v74
  %1178 = vmatpush1.msra.mxu0 %v73
  %1179 = vmatprep.subr.mxu0 %v76
  %1180 = vmatpush1.msra.mxu0 %v75
  %1181 = vmatprep.subr.mxu0 %v78
  %1182 = vmatpush1.msra.mxu0 %v77
  %1183 = vmatprep.subr.mxu0 %v80
  %1184 = vmatpush1.msra.mxu0 %v79
  %1185 = vmatprep.subr.mxu0 %v82
  %1186 = vmatpush1.msra.mxu0 %v81
  %1187 = vmatprep.subr.mxu0 %v84
  %1188 = vmatpush1.msra.mxu0 %v83
  %1189 = vmatprep.subr.mxu0 %v86
  %1190 = vmatpush1.msra.mxu0 %v85
  %1191 = vmatprep.subr.mxu0 %v88
  %1192 = vmatpush1.msra.mxu0 %v87
  %1193 = vmatprep.subr.mxu0 %v90
  %1194 = vmatpush1.msra.mxu0 %v89
  %1195 = vmatprep.subr.mxu0 %v92
  %1196 = vmatpush1.msra.mxu0 %v91
  %1197 = vmatprep.mubr.f32.mxu0 %v1118
  %1198 = vmatmul.mubr.f32.gmra.mrb[0].mxu0 %v1117
  %v1199 = vpop.f32.mrb[0].mxu0
  %v1200 = vadd.f32 0.0, %v1199
  %v1201 = vpop.f32.mrb[0].mxu0
  %v1202 = vadd.f32 0.0, %v1201
  %1203 = vmatprep.mubr.f32.mxu0 %v1120
  %1204 = vmatmul.mubr.f32.gmra.mrb[0].mxu0 %v1119
  %v1205 = vpop.f32.mrb[0].mxu0
  %v1206 = vadd.f32 0.0, %v1205
  %v1207 = vpop.f32.mrb[0].mxu0
  %v1208 = vadd.f32 0.0, %v1207
  %1209 = vmatprep.mubr.f32.mxu0 %v1122
  %1210 = vmatmul.mubr.f32.gmra.mrb[0].mxu0 %v1121
  %v1211 = vpop.f32.mrb[0].mxu0
  %v1212 = vadd.f32 0.0, %v1211
  %v1213 = vpop.f32.mrb[0].mxu0
  %v1214 = vadd.f32 0.0, %v1213
  %1215 = vmatprep.mubr.f32.mxu0 %v1124
  %1216 = vmatmul.mubr.f32.gmra.mrb[0].mxu0 %v1123
  %v1217 = vpop.f32.mrb[0].mxu0
  %v1218 = vadd.f32 0.0, %v1217
  %v1219 = vpop.f32.mrb[0].mxu0
  %v1220 = vadd.f32 0.0, %v1219
  %1221 = vmatprep.mubr.f32.mxu0 %v1126
  %1222 = vmatmul.mubr.f32.gmra.mrb[0].mxu0 %v1125
  %v1223 = vpop.f32.mrb[0].mxu0
  %v1224 = vadd.f32 0.0, %v1223
  %v1225 = vpop.f32.mrb[0].mxu0
  %v1226 = vadd.f32 0.0, %v1225
  %1227 = vmatprep.mubr.f32.mxu0 %v1128
  %1228 = vmatmul.mubr.f32.gmra.mrb[0].mxu0 %v1127
  %v1229 = vpop.f32.mrb[0].mxu0
  %v1230 = vadd.f32 0.0, %v1229
  %v1231 = vpop.f32.mrb[0].mxu0
  %v1232 = vadd.f32 0.0, %v1231
  %1233 = vmatprep.mubr.f32.mxu0 %v1130
  %1234 = vmatmul.mubr.f32.gmra.mrb[0].mxu0 %v1129
  %v1235 = vpop.f32.mrb[0].mxu0
  %v1236 = vadd.f32 0.0, %v1235
  %v1237 = vpop.f32.mrb[0].mxu0
  %v1238 = vadd.f32 0.0, %v1237
  %1239 = vmatprep.mubr.f32.mxu0 %v1132
  %1240 = vmatmul.mubr.f32.gmra.mrb[0].mxu0 %v1131
  %v1241 = vpop.f32.mrb[0].mxu0
  %v1242 = vadd.f32 0.0, %v1241
  %v1243 = vpop.f32.mrb[0].mxu0
  %v1244 = vadd.f32 0.0, %v1243
  %1245 = vdwg.mxu0
  %v1246 = vmul.f32 %v1200, %v1200
  %v1247 = vmul.f32 %v1202, %v1202
  %v1248 = vmul.f32 %v1206, %v1206
  %v1249 = vmul.f32 %v1208, %v1208
  %v1250 = vmul.f32 %v1212, %v1212
  %v1251 = vmul.f32 %v1214, %v1214
  %v1252 = vmul.f32 %v1218, %v1218
  %v1253 = vmul.f32 %v1220, %v1220
  %v1254 = vsub.f32 %v1224, %v1246
  %v1255 = vsub.f32 %v1226, %v1247
  %v1256 = vsub.f32 %v1230, %v1248
  %v1257 = vsub.f32 %v1232, %v1249
  %v1258 = vsub.f32 %v1236, %v1250
  %v1259 = vsub.f32 %v1238, %v1251
  %v1260 = vsub.f32 %v1242, %v1252
  %v1261 = vsub.f32 %v1244, %v1253
  %v1262 = vsub.f32 %v1117, %v1200
  %v1263 = vsub.f32 %v1118, %v1202
  %v1264 = vsub.f32 %v1119, %v1206
  %v1265 = vsub.f32 %v1120, %v1208
  %v1266 = vsub.f32 %v1121, %v1212
  %v1267 = vsub.f32 %v1122, %v1214
  %v1268 = vsub.f32 %v1123, %v1218
  %v1269 = vsub.f32 %v1124, %v1220
  %v1270 = vadd.f32 %v1254, 1e-05
  %v1271 = vadd.f32 %v1255, 1e-05
  %v1272 = vadd.f32 %v1256, 1e-05
  %v1273 = vadd.f32 %v1257, 1e-05
  %v1274 = vadd.f32 %v1258, 1e-05
  %v1275 = vadd.f32 %v1259, 1e-05
  %v1276 = vadd.f32 %v1260, 1e-05
  %v1277 = vadd.f32 %v1261, 1e-05
  %v1278 = vrsqrt.pop %v1270
  %v1279 = vrsqrt.pop %v1271
  %v1280 = vrsqrt.pop %v1272
  %v1281 = vrsqrt.pop %v1273
  %v1282 = vrsqrt.pop %v1274
  %v1283 = vrsqrt.pop %v1275
  %v1284 = vrsqrt.pop %v1276
  %v1285 = vrsqrt.pop %v1277
  %v1286 = vmul.f32 %v1262, %v1278
  %v1287 = vmul.f32 %v1263, %v1279
  %v1288 = vmul.f32 %v1264, %v1280
  %v1289 = vmul.f32 %v1265, %v1281
  %v1290 = vmul.f32 %v1266, %v1282
  %v1291 = vmul.f32 %v1267, %v1283
  %v1292 = vmul.f32 %v1268, %v1284
  %v1293 = vmul.f32 %v1269, %v1285
  %v1294 = vmul.f32 %v1286, %v694
  %v1295 = vmul.f32 %v1287, %v698
  %v1296 = vmul.f32 %v1288, %v694
  %v1297 = vmul.f32 %v1289, %v698
  %v1298 = vmul.f32 %v1290, %v694
  %v1299 = vmul.f32 %v1291, %v698
  %v1300 = vmul.f32 %v1292, %v694
  %v1301 = vmul.f32 %v1293, %v698
  %v1302 = vadd.f32 %v1294, %v713
  %v1303 = vadd.f32 %v1295, %v717
  %v1304 = vadd.f32 %v1296, %v713
  %v1305 = vadd.f32 %v1297, %v717
  %v1306 = vadd.f32 %v1298, %v713
  %v1307 = vadd.f32 %v1299, %v717
  %v1308 = vadd.f32 %v1300, %v713
  %v1309 = vadd.f32 %v1301, %v717
  %v1310 = vmax.f32 %v1302, 0.0
  %v1311 = vmax.f32 %v1303, 0.0
  %v1312 = vmax.f32 %v1304, 0.0
  %v1313 = vmax.f32 %v1305, 0.0
  %v1314 = vmax.f32 %v1306, 0.0
  %v1315 = vmax.f32 %v1307, 0.0
  %v1316 = vmax.f32 %v1308, 0.0
  %v1317 = vmax.f32 %v1309, 0.0
  %v1318 = vadd.f32 %v1310, %v95
  %v1319 = vadd.f32 %v1311, %v96
  %v1320 = vadd.f32 %v1312, %v97
  %v1321 = vadd.f32 %v1313, %v98
  %v1322 = vadd.f32 %v1314, %v99
  %v1323 = vadd.f32 %v1315, %v100
  %v1324 = vadd.f32 %v1316, %v101
  %v1325 = vadd.f32 %v1317, %v102
  %1326 = vst [vmem:[%s8] sm:$0xff] %v1318
  %1327 = vst [vmem:[%s8 + $0x8] sm:$0xff] %v1319
  %1328 = vst [vmem:[%s8 + $0x10] sm:$0xff] %v1320
  %1329 = vst [vmem:[%s8 + $0x18] sm:$0xff] %v1321
  %1330 = vst [vmem:[%s8 + $0x20] sm:$0xff] %v1322
  %1331 = vst [vmem:[%s8 + $0x28] sm:$0xff] %v1323
  %1332 = vst [vmem:[%s8 + $0x30] sm:$0xff] %v1324
  %1333 = vst [vmem:[%s8 + $0x38] sm:$0xff] %v1325
  // Predicated region
  $region34: #{temporal_block_stack.1} parent=0 // pred_check
    _
  $region35: #{temporal_block_stack.1} parent=0 // pred_check_branch
    %1335 = sbr.rel (0) target = $region37
  $region36: #{temporal_block_stack.1} parent=0 // pred_region
    _
  $region37: #{temporal_block_stack.1} parent=0 // pred_fallthru
    _
  // Predicated region
  $region38: #{temporal_block_stack.1} parent=0 // pred_check
    _
  $region39: #{temporal_block_stack.1} parent=0 // pred_check_branch
    %1337 = sbr.rel (0) target = $region41
  $region40: #{temporal_block_stack.1} parent=0 // pred_region
    _
  $region41: #{temporal_block_stack.1} parent=0 // pred_fallthru
    _

</llo_original>
